<compile_context>
chip_gen: v7x
topology: tpu7x:2x2x1
jax: 0.10.0
libtpu: 0.0.40
codegen_flags: <defaults>
</compile_context>

<pallas_src>
import jax
import jax.numpy as jnp
from jax.experimental import pallas as pl
from jax.experimental.pallas import tpu as pltpu


def add_relu_matmul_kernel(a_ref, b_ref, w_ref, o_ref):
    # a_ref, b_ref: (Cin, HW) f32 activations, VMEM-resident across Cout tiles.
    # w_ref:        (tn, Cin) bf16 weight tile, streamed / double-buffered.
    # o_ref:        (tn, HW)  f32 output tile.
    x = jnp.maximum(a_ref[...] + b_ref[...], 0.0).astype(jnp.bfloat16)
    o_ref[...] = jnp.dot(
        w_ref[...], x, preferred_element_type=jnp.float32
    ).astype(o_ref.dtype)


def _pick_cout_tile(cout: int, target: int) -> int:
    # Largest tile <= target that divides Cout; fall back to full Cout.
    for t in (target, 256, 128, 64, 32, 16, 8):
        if t <= cout and cout % t == 0:
            return t
    return cout


def _cout_tile_target() -> int:
    # v7x: two TensorCores split the parallel grid -> tn=128 gives each core
    # >=4 pipeline steps over Cout=1024.  v5e/v6e: single TC -> tn=256 keeps
    # the number of ~0.35 us per-step overheads low.
    try:
        kind = jax.devices()[0].device_kind.lower()
    except Exception:
        kind = ""
    return 128 if "v7" in kind else 256


def add_relu_conv1x1(x258, x250, weight):
    """x258, x250: (N, Cin, H, W) float32.  weight: (Cout, Cin, 1, 1) float32.

    Returns (N, Cout, H, W) = conv2d(relu(x258 + x250)), 1x1 kernel, stride 1,
    no bias.  MXU runs in bf16 with f32 accumulation.
    """
    N, Cin, H, W = x258.shape
    Cout = weight.shape[0]
    HW = H * W
    tn = _pick_cout_tile(Cout, _cout_tile_target())

    # Pure views (no HBM traffic): NCHW is already channel-major for a 1x1 conv.
    a = x258.reshape(N, Cin, HW)
    b = x250.reshape(N, Cin, HW)
    # Weight stored/streamed as bf16 (in a real network this cast is a one-time
    # constant prep); accumulation stays f32 inside the kernel.
    w = weight.reshape(Cout, Cin).astype(jnp.bfloat16)

    out_itemsize = jnp.dtype(x258.dtype).itemsize
    bytes_accessed = int(
        a.size * a.dtype.itemsize
        + b.size * b.dtype.itemsize
        + w.size * w.dtype.itemsize
        + N * Cout * HW * out_itemsize
    )
    flops = int(2 * N * Cout * Cin * HW + 2 * N * Cin * HW)

    out = pl.pallas_call(
        add_relu_matmul_kernel,
        out_shape=jax.ShapeDtypeStruct((N, Cout, HW), x258.dtype),
        # j (Cout tiles) outer, n (batch) inner: the weight tile's block index
        # is constant along the inner axis, so it is fetched once per tile
        # even when N > 1.  Both axes are independent work -> "parallel"
        # (j splits across v7x's two TensorCores).
        grid=(Cout // tn, N),
        in_specs=[
            # Activations: constant block index along the Cout axis -> resident.
            pl.BlockSpec((None, Cin, HW), lambda j, n: (n, 0, 0)),
            pl.BlockSpec((None, Cin, HW), lambda j, n: (n, 0, 0)),
            # Weight: tiled along Cout, streamed through the pipeline (bf16).
            pl.BlockSpec((tn, Cin), lambda j, n: (j, 0)),
        ],
        out_specs=pl.BlockSpec((None, tn, HW), lambda j, n: (n, j, 0)),
        compiler_params=pltpu.CompilerParams(
            dimension_semantics=("parallel", "parallel"),
        ),
        cost_estimate=pl.CostEstimate(
            flops=flops, transcendentals=0, bytes_accessed=bytes_accessed
        ),
    )(a, b, w)

    return out.reshape(N, Cout, H, W)


if __name__ == "__main__":
    # Shapes fixed by the module: Conv2d(1024, 1024, 1x1) => Cin = Cout = 1024.
    N, Cin, Cout, H, W = 1, 1024, 1024, 14, 14

    key = jax.random.PRNGKey(0)
    k1, k2, k3 = jax.random.split(key, 3)
    x258 = jax.random.normal(k1, (N, Cin, H, W), dtype=jnp.float32)
    x250 = jax.random.normal(k2, (N, Cin, H, W), dtype=jnp.float32)
    # Deterministic synthetic conv weight (Cout, Cin, 1, 1), kaiming-like scale.
    weight = jax.random.normal(k3, (Cout, Cin, 1, 1), dtype=jnp.float32) * (
        1.0 / jnp.sqrt(Cin)
    )

    out = jax.block_until_ready(add_relu_conv1x1(x258, x250, weight))
    assert out.shape == (N, Cout, H, W)

    # References.
    x = jnp.maximum(x258 + x250, 0.0).reshape(N, Cin, H * W)
    w2 = weight.reshape(Cout, Cin)

    # (1) Matched-precision reference (bf16 MXU operands, f32 accumulation):
    #     tight check of the kernel plumbing.
    ref_bf16 = jnp.einsum(
        "oc,ncs->nos",
        w2.astype(jnp.bfloat16),
        x.astype(jnp.bfloat16),
        preferred_element_type=jnp.float32,
    ).reshape(N, Cout, H, W)
    assert jnp.allclose(out, ref_bf16, atol=1e-3, rtol=1e-3)

    # (2) Full-f32 reference: bf16 MXU inputs over a K=1024 contraction give
    #     ~1e-3 relative rounding noise, so use a correspondingly wider band.
    ref_f32 = jnp.einsum("oc,ncs->nos", w2, x, precision="highest").reshape(
        N, Cout, H, W
    )
    assert jnp.allclose(out, ref_f32, atol=2e-2, rtol=2e-2)

    print("KERNEL_OK")
</pallas_src>

<mosaic_0001>
module attributes {stable_mosaic.version = 11 : i64} {
  func.func @add_relu_matmul_kernel(%arg0: i32, %arg1: i32, %arg2: memref<1x1024x196xf32, #tpu.memory_space<vmem>>, %arg3: memref<1x1024x196xf32, #tpu.memory_space<vmem>>, %arg4: memref<256x1024xbf16, #tpu.memory_space<vmem>>, %arg5: memref<1x256x196xf32, #tpu.memory_space<vmem>>) attributes {dimension_semantics = [#tpu.dimension_semantics<parallel>, #tpu.dimension_semantics<parallel>], iteration_bounds = array<i64: 4, 1>, scalar_prefetch = 0 : i64, scratch_operands = 0 : i64, tpu.core_type = #tpu.core_type<tc>, window_params = [{transform_indices = @transform_0, window_bounds = array<i64: 1, 1024, 196>}, {transform_indices = @transform_1, window_bounds = array<i64: 1, 1024, 196>}, {transform_indices = @transform_2, window_bounds = array<i64: 256, 1024>}, {transform_indices = @transform_3, window_bounds = array<i64: 1, 256, 196>}]} {
    %c0 = arith.constant 0 : index
    %c0_0 = arith.constant 0 : index
    %c0_1 = arith.constant 0 : index
    %0 = vector.load %arg2[%c0, %c0_0, %c0_1] : memref<1x1024x196xf32, #tpu.memory_space<vmem>>, vector<1x1024x196xf32>
    %1 = vector.shape_cast %0 : vector<1x1024x196xf32> to vector<1024x196xf32>
    %c0_2 = arith.constant 0 : index
    %c0_3 = arith.constant 0 : index
    %c0_4 = arith.constant 0 : index
    %2 = vector.load %arg3[%c0_2, %c0_3, %c0_4] : memref<1x1024x196xf32, #tpu.memory_space<vmem>>, vector<1x1024x196xf32>
    %3 = vector.shape_cast %2 : vector<1x1024x196xf32> to vector<1024x196xf32>
    %4 = arith.addf %1, %3 : vector<1024x196xf32>
    %cst = arith.constant 0.000000e+00 : f32
    %5 = vector.broadcast %cst : f32 to vector<1024x196xf32>
    %6 = arith.maximumf %4, %5 : vector<1024x196xf32>
    %7 = arith.truncf %6 : vector<1024x196xf32> to vector<1024x196xbf16>
    %c0_5 = arith.constant 0 : index
    %c0_6 = arith.constant 0 : index
    %8 = vector.load %arg4[%c0_5, %c0_6] : memref<256x1024xbf16, #tpu.memory_space<vmem>>, vector<256x1024xbf16>
    %cst_7 = arith.constant dense<0.000000e+00> : vector<256x196xf32>
    %9 = tpu.matmul %8, %7, %cst_7 {dimension_numbers = #tpu.dot_dimension_numbers<[1], [0], [0], [1], [0, 0, 1, 1], [], []>} : vector<256x1024xbf16>, vector<1024x196xbf16>, vector<256x196xf32> -> vector<256x196xf32>
    %c0_8 = arith.constant 0 : index
    %c0_9 = arith.constant 0 : index
    %c0_10 = arith.constant 0 : index
    %10 = vector.load %arg5[%c0_8, %c0_9, %c0_10] : memref<1x256x196xf32, #tpu.memory_space<vmem>>, vector<1x256x196xf32>
    %11 = vector.shape_cast %10 : vector<1x256x196xf32> to vector<256x196xf32>
    %12 = vector.shape_cast %9 : vector<256x196xf32> to vector<1x256x196xf32>
    tpu.vector_store %arg5[%c0_8, %c0_9, %c0_10], %12 {strides = array<i32>} : memref<1x256x196xf32, #tpu.memory_space<vmem>>, vector<1x256x196xf32>,
    return
  }
  func.func @transform_0(%arg0: i32, %arg1: i32) -> (i32, i32, i32) {
    %c0_i32 = arith.constant 0 : i32
    %c0_i32_0 = arith.constant 0 : i32
    %c0_i32_1 = arith.constant 0 : i32
    return %arg1, %c0_i32, %c0_i32_0 : i32, i32, i32
  }
  func.func @transform_1(%arg0: i32, %arg1: i32) -> (i32, i32, i32) {
    %c0_i32 = arith.constant 0 : i32
    %c0_i32_0 = arith.constant 0 : i32
    %c0_i32_1 = arith.constant 0 : i32
    return %arg1, %c0_i32, %c0_i32_0 : i32, i32, i32
  }
  func.func @transform_2(%arg0: i32, %arg1: i32) -> (i32, i32) {
    %c0_i32 = arith.constant 0 : i32
    %c0_i32_0 = arith.constant 0 : i32
    return %arg0, %c0_i32 : i32, i32
  }
  func.func @transform_3(%arg0: i32, %arg1: i32) -> (i32, i32, i32) {
    %c0_i32 = arith.constant 0 : i32
    %c0_i32_0 = arith.constant 0 : i32
    return %arg1, %arg0, %c0_i32 : i32, i32, i32
  }
}

</mosaic_0001>

<llo_original>
// kernel: tpu_custom_call.1
$region0: #{tpu_custom_call.1}
  #allocation0 [shape = 'u32[]', space=smem, size = 0x4, offset = 0x4, fixed_abs, tag = 'smem constant byte address 0x4 - core index']
  #allocation1 [shape = 'u32[144,128]{1,0:T(1,128)}', space=vmem, size = 0x12000, scoped, tag = 'internal scratch']
  %s0 = inlined_call_operand.vmem [shape: f32[1,1024,196], index: 0, kind: input, shape index: {}]
  %s1 = inlined_call_operand.vmem [shape: f32[1,1024,196], index: 1, kind: input, shape index: {}]
  %s2 = inlined_call_operand.vmem [shape: bf16[1024,1024], index: 2, kind: input, shape index: {}]
  %s3 = inlined_call_operand.vmem [shape: f32[1,1024,196], index: 3, kind: output, shape index: {}]
  %s4 = sld [smem:[#allocation0]]
  $region45: #{tpu_custom_call.1} parent=0
    _
  %s6 = ssub.s32 1, %s4
  %s7 = scalar_select 0, %s6, %s4
  loop: start=0, step=1, limit=6
  $region2: #{tpu_custom_call.1} parent=0 // loop_pre_header
    _
  $region3: #{tpu_custom_call.1} parent=0 // loop_header
    %s9 = sphi 0, %s13
    %p10 = scmp.ge.s32.totalorder %s9, 6
    %s16 = sphi 0, %s28
    %s17 = sphi 0, %s24
    %s18 = sphi 0, %s16
    %s19 = sphi 0, %s17
    %s20 = sphi 0, %s18
    %s21 = sphi 0, %s19
    %s31 = sphi 0, %s33
    %s34 = sphi 0, %s31
    %s35 = sphi 0, %s34
    %s51 = sphi 0, %s35
    %s57 = sphi 0, %s59
    %s60 = sphi 0, %s57
    %s61 = sphi 0, %s60
    %s77 = sphi 0, %s61
    %s83 = sphi 0, %s85
    %s86 = sphi 0, %s83
    %s87 = sphi 0, %s86
    %s103 = sphi 0, %s87
    %s111 = sphi 0, %s113
    %s114 = sphi 0, %s111
    %s115 = sphi 0, %s114
    %s131 = sphi 0, %s115
  $region4: #{tpu_custom_call.1} parent=0 // loop_header_branch
    %12 = sbr.rel (%p10) target = $region8
  $region5: #{tpu_custom_call.1} parent=0 // loop_body
    %s14 = ssub.s32 %s9, 1
    %s15 = ssub.s32 %s9, 2
    %s22 = sadd.s32 1, %s17
    %p23 = scmp.ge.s32.totalorder %s22, 1
    %s24 = scalar_select %p23, 0, %s22
    %s25 = sadd.s32 1, %s16
    %s26 = scalar_select %p23, %s25, %s16
    %p27 = scmp.ge.s32.totalorder %s26, 4
    %s28 = scalar_select %p27, 0, %s26
    %s29 = ssub.s32 %s17, %s24
    %p30 = scmp.eq.s32.totalorder %s29, 0
    %s32 = sadd.s32 %s31, 1
    %s33 = scalar_select %p30, %s31, %s32
    %p36 = pneg %p30
    %p37 = scmp.eq.s32.totalorder %s9, 3
    %p38 = por %p36, %p37
    %p39 = scmp.ne.s32.totalorder %s31, %s34
    %p40 = scmp.eq.s32.totalorder %s9, 0
    %p41 = por %p39, %p40
    %p42 = scmp.ne.s32.totalorder %s31, %s34
    %p43 = scmp.eq.s32.totalorder %s14, 3
    %p44 = por %p42, %p43
    %p45 = scmp.ne.s32.totalorder %s34, %s35
    %p46 = scmp.eq.s32.totalorder %s14, 0
    %p47 = por %p45, %p46
    %p48 = scmp.ne.s32.totalorder %s34, %s35
    %p49 = scmp.eq.s32.totalorder %s15, 3
    %p50 = por %p48, %p49
    %p52 = scmp.ne.s32.totalorder %s35, %s51
    %p53 = scmp.eq.s32.totalorder %s15, 0
    %p54 = por %p52, %p53
    %s55 = ssub.s32 %s17, %s24
    %p56 = scmp.eq.s32.totalorder %s55, 0
    %s58 = sadd.s32 %s57, 1
    %s59 = scalar_select %p56, %s57, %s58
    %p62 = pneg %p56
    %p63 = scmp.eq.s32.totalorder %s9, 3
    %p64 = por %p62, %p63
    %p65 = scmp.ne.s32.totalorder %s57, %s60
    %p66 = scmp.eq.s32.totalorder %s9, 0
    %p67 = por %p65, %p66
    %p68 = scmp.ne.s32.totalorder %s57, %s60
    %p69 = scmp.eq.s32.totalorder %s14, 3
    %p70 = por %p68, %p69
    %p71 = scmp.ne.s32.totalorder %s60, %s61
    %p72 = scmp.eq.s32.totalorder %s14, 0
    %p73 = por %p71, %p72
    %p74 = scmp.ne.s32.totalorder %s60, %s61
    %p75 = scmp.eq.s32.totalorder %s15, 3
    %p76 = por %p74, %p75
    %p78 = scmp.ne.s32.totalorder %s61, %s77
    %p79 = scmp.eq.s32.totalorder %s15, 0
    %p80 = por %p78, %p79
    %s81 = ssub.s32 %s16, %s28
    %p82 = scmp.eq.s32.totalorder %s81, 0
    %s84 = sadd.s32 %s83, 1
    %s85 = scalar_select %p82, %s83, %s84
    %p88 = pneg %p82
    %p89 = scmp.eq.s32.totalorder %s9, 3
    %p90 = por %p88, %p89
    %p91 = scmp.ne.s32.totalorder %s83, %s86
    %p92 = scmp.eq.s32.totalorder %s9, 0
    %p93 = por %p91, %p92
    %p94 = scmp.ne.s32.totalorder %s83, %s86
    %p95 = scmp.eq.s32.totalorder %s14, 3
    %p96 = por %p94, %p95
    %p97 = scmp.ne.s32.totalorder %s86, %s87
    %p98 = scmp.eq.s32.totalorder %s14, 0
    %p99 = por %p97, %p98
    %p100 = scmp.ne.s32.totalorder %s86, %s87
    %p101 = scmp.eq.s32.totalorder %s15, 3
    %p102 = por %p100, %p101
    %p104 = scmp.ne.s32.totalorder %s87, %s103
    %p105 = scmp.eq.s32.totalorder %s15, 0
    %p106 = por %p104, %p105
    %s107 = ssub.s32 %s17, %s24
    %s108 = ssub.s32 %s16, %s28
    %s109 = sor.u32 %s107, %s108
    %p110 = scmp.eq.s32.totalorder %s109, 0
    %s112 = sadd.s32 %s111, 1
    %s113 = scalar_select %p110, %s111, %s112
    %p116 = pneg %p110
    %p117 = scmp.eq.s32.totalorder %s9, 3
    %p118 = por %p116, %p117
    %p119 = scmp.ne.s32.totalorder %s111, %s114
    %p120 = scmp.eq.s32.totalorder %s9, 0
    %p121 = por %p119, %p120
    %p122 = scmp.ne.s32.totalorder %s111, %s114
    %p123 = scmp.eq.s32.totalorder %s14, 3
    %p124 = por %p122, %p123
    %p125 = scmp.ne.s32.totalorder %s114, %s115
    %p126 = scmp.eq.s32.totalorder %s14, 0
    %p127 = por %p125, %p126
    %p128 = scmp.ne.s32.totalorder %s114, %s115
    %p129 = scmp.eq.s32.totalorder %s15, 3
    %p130 = por %p128, %p129
    %p132 = scmp.ne.s32.totalorder %s115, %s131
    %p133 = scmp.eq.s32.totalorder %s15, 0
    %p134 = por %p132, %p133
    %p135 = scmp.le.s32.totalorder 1, %s9
    %p136 = scmp.lt.s32.totalorder %s9, 5
    %p137 = pnand %p135, %p136
    %p138 = pneg %p137
    // Predicated region
    $region9: #{tpu_custom_call.1} parent=5 // pred_check
      _
    $region10: #{tpu_custom_call.1} parent=5 // pred_check_branch
      %140 = sbr.rel (%p137) target = $region12
    $region11: #{tpu_custom_call.1} parent=5 // pred_region
      %s141 = ssub.s32 %s9, 1
      // Predicated region
      $region13: #{tpu_custom_call.1} parent=11 // pred_check
        %p142 = pneg %p47
      $region14: #{tpu_custom_call.1} parent=11 // pred_check_branch
        %144 = sbr.rel (%p142) target = $region16
      $region15: #{tpu_custom_call.1} parent=11 // pred_region
        %p145 = scmp.lt.s32.totalorder %s19, 0
        %s146 = scalar_select %p145, %s19, 0
        %s147 = smul.addr %s146, 256
        %s148 = smul.addr %s147, 8
        %s149 = scalar_lea.vmem %s0, %s148
      $region16: #{tpu_custom_call.1} parent=11 // pred_fallthru
        _
      // Predicated region
      $region17: #{tpu_custom_call.1} parent=11 // pred_check
        %p150 = pneg %p73
      $region18: #{tpu_custom_call.1} parent=11 // pred_check_branch
        %152 = sbr.rel (%p150) target = $region20
      $region19: #{tpu_custom_call.1} parent=11 // pred_region
        %p153 = scmp.lt.s32.totalorder %s19, 0
        %s154 = scalar_select %p153, %s19, 0
        %s155 = smul.addr %s154, 256
        %s156 = smul.addr %s155, 8
        %s157 = scalar_lea.vmem %s1, %s156
      $region20: #{tpu_custom_call.1} parent=11 // pred_fallthru
        _
    $region12: #{tpu_custom_call.1} parent=5 // pred_fallthru
      _
    %p158 = scmp.lt.s32.totalorder %s9, 4
    // Predicated region
    $region21: #{tpu_custom_call.1} parent=5 // pred_check
      %p159 = pneg %p158
    $region22: #{tpu_custom_call.1} parent=5 // pred_check_branch
      %161 = sbr.rel (%p159) target = $region24
    $region23: #{tpu_custom_call.1} parent=5 // pred_region
      // Predicated region
      $region25: #{tpu_custom_call.1} parent=23 // pred_check
        %p162 = pneg %p93
      $region26: #{tpu_custom_call.1} parent=23 // pred_check_branch
        %164 = sbr.rel (%p162) target = $region28
      $region27: #{tpu_custom_call.1} parent=23 // pred_region
        %s165 = smul.u32 32, %s16
        %p166 = scmp.lt.s32.totalorder %s165, 127
        %s167 = scalar_select %p166, %s165, 127
        %s168 = smul.addr %s167, 8
        %s169 = smul.addr %s168, 4
        %s170 = scalar_lea.vmem %s2, %s169
        %s171 = smul.u32 32, %s16
      $region28: #{tpu_custom_call.1} parent=23 // pred_fallthru
        _
    $region24: #{tpu_custom_call.1} parent=5 // pred_fallthru
      _
    %p172 = scmp.le.s32.totalorder 1, %s9
    %p173 = scmp.lt.s32.totalorder %s9, 5
    %p174 = pnand %p172, %p173
    %p175 = pneg %p174
    // Predicated region
    $region29: #{tpu_custom_call.1} parent=5 // pred_check
      _
    $region30: #{tpu_custom_call.1} parent=5 // pred_check_branch
      %177 = sbr.rel (%p174) target = $region32
    $region31: #{tpu_custom_call.1} parent=5 // pred_region
      %s178 = ssub.s32 %s9, 1
      %p179 = scmp.lt.s32.totalorder %s19, 0
      %s180 = scalar_select %p179, %s19, 0
      %s181 = smul.addr %s180, 256
      %s182 = smul.addr %s181, 8
      %s183 = scalar_lea.vmem %s0, %s182
      %p184 = pneg %p47
      %p185 = pneg %p44
      %p186 = scmp.lt.s32.totalorder %s19, 0
      %s187 = scalar_select %p186, %s19, 0
      %s188 = smul.addr %s187, 256
      %s189 = smul.addr %s188, 8
      %s190 = scalar_lea.vmem %s1, %s189
      %p191 = pneg %p73
      %p192 = pneg %p70
      %s193 = smul.u32 32, %s18
      %p194 = scmp.lt.s32.totalorder %s193, 127
      %s195 = scalar_select %p194, %s193, 127
      %s196 = smul.addr %s195, 8
      %s197 = smul.addr %s196, 4
      %s198 = scalar_lea.vmem %s2, %s197
      %p199 = pneg %p99
      %p200 = pneg %p96
      %p201 = pneg %p127
      %p202 = pneg %p124
      %s203 = smul.u32 32, %s18
      %p204 = scmp.lt.s32.totalorder %s19, 0
      %s205 = scalar_select %p204, %s19, 0
      %p206 = scmp.lt.s32.totalorder %s203, 127
      %s207 = scalar_select %p206, %s203, 127
      %s208 = smul.addr %s207, 2
      %s209 = smul.addr %s205, 256
      %s210 = sadd.s32 %s208, %s209
      %s211 = smul.addr %s210, 8
      %s212 = scalar_lea.vmem %s3, %s211
      %p213 = scmp.lt.s32.totalorder %s19, 0
      %s214 = scalar_select %p213, %s19, 0
      %s215 = smul.addr %s214, 256
      %s216 = smul.addr %s215, 8
      %s217 = scalar_lea.vmem %s0, %s216
      %p218 = scmp.lt.s32.totalorder %s19, 0
      %s219 = scalar_select %p218, %s19, 0
      %s220 = smul.addr %s219, 256
      %s221 = smul.addr %s220, 8
      %s222 = scalar_lea.vmem %s1, %s221
      %s223 = smul.u32 32, %s18
      %p224 = scmp.lt.s32.totalorder %s223, 127
      %s225 = scalar_select %p224, %s223, 127
      %s226 = smul.addr %s225, 8
      %s227 = smul.addr %s226, 4
      %s228 = scalar_lea.vmem %s2, %s227
      %s229 = smul.u32 32, %s18
      %s230 = smul.u32 32, %s18
      %p231 = scmp.lt.s32.totalorder %s19, 0
      %s232 = scalar_select %p231, %s19, 0
      %p233 = scmp.lt.s32.totalorder %s230, 127
      %s234 = scalar_select %p233, %s230, 127
      %s235 = smul.addr %s234, 2
      %s236 = smul.addr %s232, 256
      %s237 = sadd.s32 %s235, %s236
      %s238 = smul.addr %s237, 8
      %s239 = scalar_lea.vmem %s3, %s238
      %s240 = smul.u32 32, %s18
      %v241 = vld [vmem:[%s217] sm:$0xff]
      %v242 = vld [vmem:[%s217 + $0x8] sm:$0xff]
      %v243 = vld [vmem:[%s217 + $0x10] sm:$0xff]
      %v244 = vld [vmem:[%s217 + $0x18] sm:$0xff]
      %v245 = vld [vmem:[%s217 + $0x20] sm:$0xff]
      %v246 = vld [vmem:[%s217 + $0x28] sm:$0xff]
      %v247 = vld [vmem:[%s217 + $0x30] sm:$0xff]
      %v248 = vld [vmem:[%s217 + $0x38] sm:$0xff]
      %v249 = vld [vmem:[%s217 + $0x40] sm:$0xff]
      %v250 = vld [vmem:[%s217 + $0x48] sm:$0xff]
      %v251 = vld [vmem:[%s217 + $0x50] sm:$0xff]
      %v252 = vld [vmem:[%s217 + $0x58] sm:$0xff]
      %v253 = vld [vmem:[%s217 + $0x60] sm:$0xff]
      %v254 = vld [vmem:[%s217 + $0x68] sm:$0xff]
      %v255 = vld [vmem:[%s217 + $0x70] sm:$0xff]
      %v256 = vld [vmem:[%s217 + $0x78] sm:$0xff]
      %v257 = vld [vmem:[%s217 + $0x80] sm:$0xff]
      %v258 = vld [vmem:[%s217 + $0x88] sm:$0xff]
      %v259 = vld [vmem:[%s217 + $0x90] sm:$0xff]
      %v260 = vld [vmem:[%s217 + $0x98] sm:$0xff]
      %v261 = vld [vmem:[%s217 + $0xa0] sm:$0xff]
      %v262 = vld [vmem:[%s217 + $0xa8] sm:$0xff]
      %v263 = vld [vmem:[%s217 + $0xb0] sm:$0xff]
      %v264 = vld [vmem:[%s217 + $0xb8] sm:$0xff]
      %v265 = vld [vmem:[%s217 + $0xc0] sm:$0xff]
      %v266 = vld [vmem:[%s217 + $0xc8] sm:$0xff]
      %v267 = vld [vmem:[%s217 + $0xd0] sm:$0xff]
      %v268 = vld [vmem:[%s217 + $0xd8] sm:$0xff]
      %v269 = vld [vmem:[%s217 + $0xe0] sm:$0xff]
      %v270 = vld [vmem:[%s217 + $0xe8] sm:$0xff]
      %v271 = vld [vmem:[%s217 + $0xf0] sm:$0xff]
      %v272 = vld [vmem:[%s217 + $0xf8] sm:$0xff]
      %v273 = vld [vmem:[%s217 + $0x100] sm:$0xff]
      %v274 = vld [vmem:[%s217 + $0x108] sm:$0xff]
      %v275 = vld [vmem:[%s217 + $0x110] sm:$0xff]
      %v276 = vld [vmem:[%s217 + $0x118] sm:$0xff]
      %v277 = vld [vmem:[%s217 + $0x120] sm:$0xff]
      %v278 = vld [vmem:[%s217 + $0x128] sm:$0xff]
      %v279 = vld [vmem:[%s217 + $0x130] sm:$0xff]
      %v280 = vld [vmem:[%s217 + $0x138] sm:$0xff]
      %v281 = vld [vmem:[%s217 + $0x140] sm:$0xff]
      %v282 = vld [vmem:[%s217 + $0x148] sm:$0xff]
      %v283 = vld [vmem:[%s217 + $0x150] sm:$0xff]
      %v284 = vld [vmem:[%s217 + $0x158] sm:$0xff]
      %v285 = vld [vmem:[%s217 + $0x160] sm:$0xff]
      %v286 = vld [vmem:[%s217 + $0x168] sm:$0xff]
      %v287 = vld [vmem:[%s217 + $0x170] sm:$0xff]
      %v288 = vld [vmem:[%s217 + $0x178] sm:$0xff]
      %v289 = vld [vmem:[%s217 + $0x180] sm:$0xff]
      %v290 = vld [vmem:[%s217 + $0x188] sm:$0xff]
      %v291 = vld [vmem:[%s217 + $0x190] sm:$0xff]
      %v292 = vld [vmem:[%s217 + $0x198] sm:$0xff]
      %v293 = vld [vmem:[%s217 + $0x1a0] sm:$0xff]
      %v294 = vld [vmem:[%s217 + $0x1a8] sm:$0xff]
      %v295 = vld [vmem:[%s217 + $0x1b0] sm:$0xff]
      %v296 = vld [vmem:[%s217 + $0x1b8] sm:$0xff]
      %v297 = vld [vmem:[%s217 + $0x1c0] sm:$0xff]
      %v298 = vld [vmem:[%s217 + $0x1c8] sm:$0xff]
      %v299 = vld [vmem:[%s217 + $0x1d0] sm:$0xff]
      %v300 = vld [vmem:[%s217 + $0x1d8] sm:$0xff]
      %v301 = vld [vmem:[%s217 + $0x1e0] sm:$0xff]
      %v302 = vld [vmem:[%s217 + $0x1e8] sm:$0xff]
      %v303 = vld [vmem:[%s217 + $0x1f0] sm:$0xff]
      %v304 = vld [vmem:[%s217 + $0x1f8] sm:$0xff]
      %v305 = vld [vmem:[%s217 + $0x200] sm:$0xff]
      %v306 = vld [vmem:[%s217 + $0x208] sm:$0xff]
      %v307 = vld [vmem:[%s217 + $0x210] sm:$0xff]
      %v308 = vld [vmem:[%s217 + $0x218] sm:$0xff]
      %v309 = vld [vmem:[%s217 + $0x220] sm:$0xff]
      %v310 = vld [vmem:[%s217 + $0x228] sm:$0xff]
      %v311 = vld [vmem:[%s217 + $0x230] sm:$0xff]
      %v312 = vld [vmem:[%s217 + $0x238] sm:$0xff]
      %v313 = vld [vmem:[%s217 + $0x240] sm:$0xff]
      %v314 = vld [vmem:[%s217 + $0x248] sm:$0xff]
      %v315 = vld [vmem:[%s217 + $0x250] sm:$0xff]
      %v316 = vld [vmem:[%s217 + $0x258] sm:$0xff]
      %v317 = vld [vmem:[%s217 + $0x260] sm:$0xff]
      %v318 = vld [vmem:[%s217 + $0x268] sm:$0xff]
      %v319 = vld [vmem:[%s217 + $0x270] sm:$0xff]
      %v320 = vld [vmem:[%s217 + $0x278] sm:$0xff]
      %v321 = vld [vmem:[%s217 + $0x280] sm:$0xff]
      %v322 = vld [vmem:[%s217 + $0x288] sm:$0xff]
      %v323 = vld [vmem:[%s217 + $0x290] sm:$0xff]
      %v324 = vld [vmem:[%s217 + $0x298] sm:$0xff]
      %v325 = vld [vmem:[%s217 + $0x2a0] sm:$0xff]
      %v326 = vld [vmem:[%s217 + $0x2a8] sm:$0xff]
      %v327 = vld [vmem:[%s217 + $0x2b0] sm:$0xff]
      %v328 = vld [vmem:[%s217 + $0x2b8] sm:$0xff]
      %v329 = vld [vmem:[%s217 + $0x2c0] sm:$0xff]
      %v330 = vld [vmem:[%s217 + $0x2c8] sm:$0xff]
      %v331 = vld [vmem:[%s217 + $0x2d0] sm:$0xff]
      %v332 = vld [vmem:[%s217 + $0x2d8] sm:$0xff]
      %v333 = vld [vmem:[%s217 + $0x2e0] sm:$0xff]
      %v334 = vld [vmem:[%s217 + $0x2e8] sm:$0xff]
      %v335 = vld [vmem:[%s217 + $0x2f0] sm:$0xff]
      %v336 = vld [vmem:[%s217 + $0x2f8] sm:$0xff]
      %v337 = vld [vmem:[%s217 + $0x300] sm:$0xff]
      %v338 = vld [vmem:[%s217 + $0x308] sm:$0xff]
      %v339 = vld [vmem:[%s217 + $0x310] sm:$0xff]
      %v340 = vld [vmem:[%s217 + $0x318] sm:$0xff]
      %v341 = vld [vmem:[%s217 + $0x320] sm:$0xff]
      %v342 = vld [vmem:[%s217 + $0x328] sm:$0xff]
      %v343 = vld [vmem:[%s217 + $0x330] sm:$0xff]
      %v344 = vld [vmem:[%s217 + $0x338] sm:$0xff]
      %v345 = vld [vmem:[%s217 + $0x340] sm:$0xff]
      %v346 = vld [vmem:[%s217 + $0x348] sm:$0xff]
      %v347 = vld [vmem:[%s217 + $0x350] sm:$0xff]
      %v348 = vld [vmem:[%s217 + $0x358] sm:$0xff]
      %v349 = vld [vmem:[%s217 + $0x360] sm:$0xff]
      %v350 = vld [vmem:[%s217 + $0x368] sm:$0xff]
      %v351 = vld [vmem:[%s217 + $0x370] sm:$0xff]
      %v352 = vld [vmem:[%s217 + $0x378] sm:$0xff]
      %v353 = vld [vmem:[%s217 + $0x380] sm:$0xff]
      %v354 = vld [vmem:[%s217 + $0x388] sm:$0xff]
      %v355 = vld [vmem:[%s217 + $0x390] sm:$0xff]
      %v356 = vld [vmem:[%s217 + $0x398] sm:$0xff]
      %v357 = vld [vmem:[%s217 + $0x3a0] sm:$0xff]
      %v358 = vld [vmem:[%s217 + $0x3a8] sm:$0xff]
      %v359 = vld [vmem:[%s217 + $0x3b0] sm:$0xff]
      %v360 = vld [vmem:[%s217 + $0x3b8] sm:$0xff]
      %v361 = vld [vmem:[%s217 + $0x3c0] sm:$0xff]
      %v362 = vld [vmem:[%s217 + $0x3c8] sm:$0xff]
      %v363 = vld [vmem:[%s217 + $0x3d0] sm:$0xff]
      %v364 = vld [vmem:[%s217 + $0x3d8] sm:$0xff]
      %v365 = vld [vmem:[%s217 + $0x3e0] sm:$0xff]
      %v366 = vld [vmem:[%s217 + $0x3e8] sm:$0xff]
      %v367 = vld [vmem:[%s217 + $0x3f0] sm:$0xff]
      %v368 = vld [vmem:[%s217 + $0x3f8] sm:$0xff]
      %v369 = vld [vmem:[%s217 + $0x400] sm:$0xff]
      %v370 = vld [vmem:[%s217 + $0x408] sm:$0xff]
      %v371 = vld [vmem:[%s217 + $0x410] sm:$0xff]
      %v372 = vld [vmem:[%s217 + $0x418] sm:$0xff]
      %v373 = vld [vmem:[%s217 + $0x420] sm:$0xff]
      %v374 = vld [vmem:[%s217 + $0x428] sm:$0xff]
      %v375 = vld [vmem:[%s217 + $0x430] sm:$0xff]
      %v376 = vld [vmem:[%s217 + $0x438] sm:$0xff]
      %v377 = vld [vmem:[%s217 + $0x440] sm:$0xff]
      %v378 = vld [vmem:[%s217 + $0x448] sm:$0xff]
      %v379 = vld [vmem:[%s217 + $0x450] sm:$0xff]
      %v380 = vld [vmem:[%s217 + $0x458] sm:$0xff]
      %v381 = vld [vmem:[%s217 + $0x460] sm:$0xff]
      %v382 = vld [vmem:[%s217 + $0x468] sm:$0xff]
      %v383 = vld [vmem:[%s217 + $0x470] sm:$0xff]
      %v384 = vld [vmem:[%s217 + $0x478] sm:$0xff]
      %v385 = vld [vmem:[%s217 + $0x480] sm:$0xff]
      %v386 = vld [vmem:[%s217 + $0x488] sm:$0xff]
      %v387 = vld [vmem:[%s217 + $0x490] sm:$0xff]
      %v388 = vld [vmem:[%s217 + $0x498] sm:$0xff]
      %v389 = vld [vmem:[%s217 + $0x4a0] sm:$0xff]
      %v390 = vld [vmem:[%s217 + $0x4a8] sm:$0xff]
      %v391 = vld [vmem:[%s217 + $0x4b0] sm:$0xff]
      %v392 = vld [vmem:[%s217 + $0x4b8] sm:$0xff]
      %v393 = vld [vmem:[%s217 + $0x4c0] sm:$0xff]
      %v394 = vld [vmem:[%s217 + $0x4c8] sm:$0xff]
      %v395 = vld [vmem:[%s217 + $0x4d0] sm:$0xff]
      %v396 = vld [vmem:[%s217 + $0x4d8] sm:$0xff]
      %v397 = vld [vmem:[%s217 + $0x4e0] sm:$0xff]
      %v398 = vld [vmem:[%s217 + $0x4e8] sm:$0xff]
      %v399 = vld [vmem:[%s217 + $0x4f0] sm:$0xff]
      %v400 = vld [vmem:[%s217 + $0x4f8] sm:$0xff]
      %v401 = vld [vmem:[%s217 + $0x500] sm:$0xff]
      %v402 = vld [vmem:[%s217 + $0x508] sm:$0xff]
      %v403 = vld [vmem:[%s217 + $0x510] sm:$0xff]
      %v404 = vld [vmem:[%s217 + $0x518] sm:$0xff]
      %v405 = vld [vmem:[%s217 + $0x520] sm:$0xff]
      %v406 = vld [vmem:[%s217 + $0x528] sm:$0xff]
      %v407 = vld [vmem:[%s217 + $0x530] sm:$0xff]
      %v408 = vld [vmem:[%s217 + $0x538] sm:$0xff]
      %v409 = vld [vmem:[%s217 + $0x540] sm:$0xff]
      %v410 = vld [vmem:[%s217 + $0x548] sm:$0xff]
      %v411 = vld [vmem:[%s217 + $0x550] sm:$0xff]
      %v412 = vld [vmem:[%s217 + $0x558] sm:$0xff]
      %v413 = vld [vmem:[%s217 + $0x560] sm:$0xff]
      %v414 = vld [vmem:[%s217 + $0x568] sm:$0xff]
      %v415 = vld [vmem:[%s217 + $0x570] sm:$0xff]
      %v416 = vld [vmem:[%s217 + $0x578] sm:$0xff]
      %v417 = vld [vmem:[%s217 + $0x580] sm:$0xff]
      %v418 = vld [vmem:[%s217 + $0x588] sm:$0xff]
      %v419 = vld [vmem:[%s217 + $0x590] sm:$0xff]
      %v420 = vld [vmem:[%s217 + $0x598] sm:$0xff]
      %v421 = vld [vmem:[%s217 + $0x5a0] sm:$0xff]
      %v422 = vld [vmem:[%s217 + $0x5a8] sm:$0xff]
      %v423 = vld [vmem:[%s217 + $0x5b0] sm:$0xff]
      %v424 = vld [vmem:[%s217 + $0x5b8] sm:$0xff]
      %v425 = vld [vmem:[%s217 + $0x5c0] sm:$0xff]
      %v426 = vld [vmem:[%s217 + $0x5c8] sm:$0xff]
      %v427 = vld [vmem:[%s217 + $0x5d0] sm:$0xff]
      %v428 = vld [vmem:[%s217 + $0x5d8] sm:$0xff]
      %v429 = vld [vmem:[%s217 + $0x5e0] sm:$0xff]
      %v430 = vld [vmem:[%s217 + $0x5e8] sm:$0xff]
      %v431 = vld [vmem:[%s217 + $0x5f0] sm:$0xff]
      %v432 = vld [vmem:[%s217 + $0x5f8] sm:$0xff]
      %v433 = vld [vmem:[%s217 + $0x600] sm:$0xff]
      %v434 = vld [vmem:[%s217 + $0x608] sm:$0xff]
      %v435 = vld [vmem:[%s217 + $0x610] sm:$0xff]
      %v436 = vld [vmem:[%s217 + $0x618] sm:$0xff]
      %v437 = vld [vmem:[%s217 + $0x620] sm:$0xff]
      %v438 = vld [vmem:[%s217 + $0x628] sm:$0xff]
      %v439 = vld [vmem:[%s217 + $0x630] sm:$0xff]
      %v440 = vld [vmem:[%s217 + $0x638] sm:$0xff]
      %v441 = vld [vmem:[%s217 + $0x640] sm:$0xff]
      %v442 = vld [vmem:[%s217 + $0x648] sm:$0xff]
      %v443 = vld [vmem:[%s217 + $0x650] sm:$0xff]
      %v444 = vld [vmem:[%s217 + $0x658] sm:$0xff]
      %v445 = vld [vmem:[%s217 + $0x660] sm:$0xff]
      %v446 = vld [vmem:[%s217 + $0x668] sm:$0xff]
      %v447 = vld [vmem:[%s217 + $0x670] sm:$0xff]
      %v448 = vld [vmem:[%s217 + $0x678] sm:$0xff]
      %v449 = vld [vmem:[%s217 + $0x680] sm:$0xff]
      %v450 = vld [vmem:[%s217 + $0x688] sm:$0xff]
      %v451 = vld [vmem:[%s217 + $0x690] sm:$0xff]
      %v452 = vld [vmem:[%s217 + $0x698] sm:$0xff]
      %v453 = vld [vmem:[%s217 + $0x6a0] sm:$0xff]
      %v454 = vld [vmem:[%s217 + $0x6a8] sm:$0xff]
      %v455 = vld [vmem:[%s217 + $0x6b0] sm:$0xff]
      %v456 = vld [vmem:[%s217 + $0x6b8] sm:$0xff]
      %v457 = vld [vmem:[%s217 + $0x6c0] sm:$0xff]
      %v458 = vld [vmem:[%s217 + $0x6c8] sm:$0xff]
      %v459 = vld [vmem:[%s217 + $0x6d0] sm:$0xff]
      %v460 = vld [vmem:[%s217 + $0x6d8] sm:$0xff]
      %v461 = vld [vmem:[%s217 + $0x6e0] sm:$0xff]
      %v462 = vld [vmem:[%s217 + $0x6e8] sm:$0xff]
      %v463 = vld [vmem:[%s217 + $0x6f0] sm:$0xff]
      %v464 = vld [vmem:[%s217 + $0x6f8] sm:$0xff]
      %v465 = vld [vmem:[%s217 + $0x700] sm:$0xff]
      %v466 = vld [vmem:[%s217 + $0x708] sm:$0xff]
      %v467 = vld [vmem:[%s217 + $0x710] sm:$0xff]
      %v468 = vld [vmem:[%s217 + $0x718] sm:$0xff]
      %v469 = vld [vmem:[%s217 + $0x720] sm:$0xff]
      %v470 = vld [vmem:[%s217 + $0x728] sm:$0xff]
      %v471 = vld [vmem:[%s217 + $0x730] sm:$0xff]
      %v472 = vld [vmem:[%s217 + $0x738] sm:$0xff]
      %v473 = vld [vmem:[%s217 + $0x740] sm:$0xff]
      %v474 = vld [vmem:[%s217 + $0x748] sm:$0xff]
      %v475 = vld [vmem:[%s217 + $0x750] sm:$0xff]
      %v476 = vld [vmem:[%s217 + $0x758] sm:$0xff]
      %v477 = vld [vmem:[%s217 + $0x760] sm:$0xff]
      %v478 = vld [vmem:[%s217 + $0x768] sm:$0xff]
      %v479 = vld [vmem:[%s217 + $0x770] sm:$0xff]
      %v480 = vld [vmem:[%s217 + $0x778] sm:$0xff]
      %v481 = vld [vmem:[%s217 + $0x780] sm:$0xff]
      %v482 = vld [vmem:[%s217 + $0x788] sm:$0xff]
      %v483 = vld [vmem:[%s217 + $0x790] sm:$0xff]
      %v484 = vld [vmem:[%s217 + $0x798] sm:$0xff]
      %v485 = vld [vmem:[%s217 + $0x7a0] sm:$0xff]
      %v486 = vld [vmem:[%s217 + $0x7a8] sm:$0xff]
      %v487 = vld [vmem:[%s217 + $0x7b0] sm:$0xff]
      %v488 = vld [vmem:[%s217 + $0x7b8] sm:$0xff]
      %v489 = vld [vmem:[%s217 + $0x7c0] sm:$0xff]
      %v490 = vld [vmem:[%s217 + $0x7c8] sm:$0xff]
      %v491 = vld [vmem:[%s217 + $0x7d0] sm:$0xff]
      %v492 = vld [vmem:[%s217 + $0x7d8] sm:$0xff]
      %v493 = vld [vmem:[%s217 + $0x7e0] sm:$0xff]
      %v494 = vld [vmem:[%s217 + $0x7e8] sm:$0xff]
      %v495 = vld [vmem:[%s217 + $0x7f0] sm:$0xff]
      %v496 = vld [vmem:[%s217 + $0x7f8] sm:$0xff]
      %v497 = vld [vmem:[%s222] sm:$0xff]
      %v498 = vld [vmem:[%s222 + $0x8] sm:$0xff]
      %v499 = vld [vmem:[%s222 + $0x10] sm:$0xff]
      %v500 = vld [vmem:[%s222 + $0x18] sm:$0xff]
      %v501 = vld [vmem:[%s222 + $0x20] sm:$0xff]
      %v502 = vld [vmem:[%s222 + $0x28] sm:$0xff]
      %v503 = vld [vmem:[%s222 + $0x30] sm:$0xff]
      %v504 = vld [vmem:[%s222 + $0x38] sm:$0xff]
      %v505 = vld [vmem:[%s222 + $0x40] sm:$0xff]
      %v506 = vld [vmem:[%s222 + $0x48] sm:$0xff]
      %v507 = vld [vmem:[%s222 + $0x50] sm:$0xff]
      %v508 = vld [vmem:[%s222 + $0x58] sm:$0xff]
      %v509 = vld [vmem:[%s222 + $0x60] sm:$0xff]
      %v510 = vld [vmem:[%s222 + $0x68] sm:$0xff]
      %v511 = vld [vmem:[%s222 + $0x70] sm:$0xff]
      %v512 = vld [vmem:[%s222 + $0x78] sm:$0xff]
      %v513 = vld [vmem:[%s222 + $0x80] sm:$0xff]
      %v514 = vld [vmem:[%s222 + $0x88] sm:$0xff]
      %v515 = vld [vmem:[%s222 + $0x90] sm:$0xff]
      %v516 = vld [vmem:[%s222 + $0x98] sm:$0xff]
      %v517 = vld [vmem:[%s222 + $0xa0] sm:$0xff]
      %v518 = vld [vmem:[%s222 + $0xa8] sm:$0xff]
      %v519 = vld [vmem:[%s222 + $0xb0] sm:$0xff]
      %v520 = vld [vmem:[%s222 + $0xb8] sm:$0xff]
      %v521 = vld [vmem:[%s222 + $0xc0] sm:$0xff]
      %v522 = vld [vmem:[%s222 + $0xc8] sm:$0xff]
      %v523 = vld [vmem:[%s222 + $0xd0] sm:$0xff]
      %v524 = vld [vmem:[%s222 + $0xd8] sm:$0xff]
      %v525 = vld [vmem:[%s222 + $0xe0] sm:$0xff]
      %v526 = vld [vmem:[%s222 + $0xe8] sm:$0xff]
      %v527 = vld [vmem:[%s222 + $0xf0] sm:$0xff]
      %v528 = vld [vmem:[%s222 + $0xf8] sm:$0xff]
      %v529 = vld [vmem:[%s222 + $0x100] sm:$0xff]
      %v530 = vld [vmem:[%s222 + $0x108] sm:$0xff]
      %v531 = vld [vmem:[%s222 + $0x110] sm:$0xff]
      %v532 = vld [vmem:[%s222 + $0x118] sm:$0xff]
      %v533 = vld [vmem:[%s222 + $0x120] sm:$0xff]
      %v534 = vld [vmem:[%s222 + $0x128] sm:$0xff]
      %v535 = vld [vmem:[%s222 + $0x130] sm:$0xff]
      %v536 = vld [vmem:[%s222 + $0x138] sm:$0xff]
      %v537 = vld [vmem:[%s222 + $0x140] sm:$0xff]
      %v538 = vld [vmem:[%s222 + $0x148] sm:$0xff]
      %v539 = vld [vmem:[%s222 + $0x150] sm:$0xff]
      %v540 = vld [vmem:[%s222 + $0x158] sm:$0xff]
      %v541 = vld [vmem:[%s222 + $0x160] sm:$0xff]
      %v542 = vld [vmem:[%s222 + $0x168] sm:$0xff]
      %v543 = vld [vmem:[%s222 + $0x170] sm:$0xff]
      %v544 = vld [vmem:[%s222 + $0x178] sm:$0xff]
      %v545 = vld [vmem:[%s222 + $0x180] sm:$0xff]
      %v546 = vld [vmem:[%s222 + $0x188] sm:$0xff]
      %v547 = vld [vmem:[%s222 + $0x190] sm:$0xff]
      %v548 = vld [vmem:[%s222 + $0x198] sm:$0xff]
      %v549 = vld [vmem:[%s222 + $0x1a0] sm:$0xff]
      %v550 = vld [vmem:[%s222 + $0x1a8] sm:$0xff]
      %v551 = vld [vmem:[%s222 + $0x1b0] sm:$0xff]
      %v552 = vld [vmem:[%s222 + $0x1b8] sm:$0xff]
      %v553 = vld [vmem:[%s222 + $0x1c0] sm:$0xff]
      %v554 = vld [vmem:[%s222 + $0x1c8] sm:$0xff]
      %v555 = vld [vmem:[%s222 + $0x1d0] sm:$0xff]
      %v556 = vld [vmem:[%s222 + $0x1d8] sm:$0xff]
      %v557 = vld [vmem:[%s222 + $0x1e0] sm:$0xff]
      %v558 = vld [vmem:[%s222 + $0x1e8] sm:$0xff]
      %v559 = vld [vmem:[%s222 + $0x1f0] sm:$0xff]
      %v560 = vld [vmem:[%s222 + $0x1f8] sm:$0xff]
      %v561 = vld [vmem:[%s222 + $0x200] sm:$0xff]
      %v562 = vld [vmem:[%s222 + $0x208] sm:$0xff]
      %v563 = vld [vmem:[%s222 + $0x210] sm:$0xff]
      %v564 = vld [vmem:[%s222 + $0x218] sm:$0xff]
      %v565 = vld [vmem:[%s222 + $0x220] sm:$0xff]
      %v566 = vld [vmem:[%s222 + $0x228] sm:$0xff]
      %v567 = vld [vmem:[%s222 + $0x230] sm:$0xff]
      %v568 = vld [vmem:[%s222 + $0x238] sm:$0xff]
      %v569 = vld [vmem:[%s222 + $0x240] sm:$0xff]
      %v570 = vld [vmem:[%s222 + $0x248] sm:$0xff]
      %v571 = vld [vmem:[%s222 + $0x250] sm:$0xff]
      %v572 = vld [vmem:[%s222 + $0x258] sm:$0xff]
      %v573 = vld [vmem:[%s222 + $0x260] sm:$0xff]
      %v574 = vld [vmem:[%s222 + $0x268] sm:$0xff]
      %v575 = vld [vmem:[%s222 + $0x270] sm:$0xff]
      %v576 = vld [vmem:[%s222 + $0x278] sm:$0xff]
      %v577 = vld [vmem:[%s222 + $0x280] sm:$0xff]
      %v578 = vld [vmem:[%s222 + $0x288] sm:$0xff]
      %v579 = vld [vmem:[%s222 + $0x290] sm:$0xff]
      %v580 = vld [vmem:[%s222 + $0x298] sm:$0xff]
      %v581 = vld [vmem:[%s222 + $0x2a0] sm:$0xff]
      %v582 = vld [vmem:[%s222 + $0x2a8] sm:$0xff]
      %v583 = vld [vmem:[%s222 + $0x2b0] sm:$0xff]
      %v584 = vld [vmem:[%s222 + $0x2b8] sm:$0xff]
      %v585 = vld [vmem:[%s222 + $0x2c0] sm:$0xff]
      %v586 = vld [vmem:[%s222 + $0x2c8] sm:$0xff]
      %v587 = vld [vmem:[%s222 + $0x2d0] sm:$0xff]
      %v588 = vld [vmem:[%s222 + $0x2d8] sm:$0xff]
      %v589 = vld [vmem:[%s222 + $0x2e0] sm:$0xff]
      %v590 = vld [vmem:[%s222 + $0x2e8] sm:$0xff]
      %v591 = vld [vmem:[%s222 + $0x2f0] sm:$0xff]
      %v592 = vld [vmem:[%s222 + $0x2f8] sm:$0xff]
      %v593 = vld [vmem:[%s222 + $0x300] sm:$0xff]
      %v594 = vld [vmem:[%s222 + $0x308] sm:$0xff]
      %v595 = vld [vmem:[%s222 + $0x310] sm:$0xff]
      %v596 = vld [vmem:[%s222 + $0x318] sm:$0xff]
      %v597 = vld [vmem:[%s222 + $0x320] sm:$0xff]
      %v598 = vld [vmem:[%s222 + $0x328] sm:$0xff]
      %v599 = vld [vmem:[%s222 + $0x330] sm:$0xff]
      %v600 = vld [vmem:[%s222 + $0x338] sm:$0xff]
      %v601 = vld [vmem:[%s222 + $0x340] sm:$0xff]
      %v602 = vld [vmem:[%s222 + $0x348] sm:$0xff]
      %v603 = vld [vmem:[%s222 + $0x350] sm:$0xff]
      %v604 = vld [vmem:[%s222 + $0x358] sm:$0xff]
      %v605 = vld [vmem:[%s222 + $0x360] sm:$0xff]
      %v606 = vld [vmem:[%s222 + $0x368] sm:$0xff]
      %v607 = vld [vmem:[%s222 + $0x370] sm:$0xff]
      %v608 = vld [vmem:[%s222 + $0x378] sm:$0xff]
      %v609 = vld [vmem:[%s222 + $0x380] sm:$0xff]
      %v610 = vld [vmem:[%s222 + $0x388] sm:$0xff]
      %v611 = vld [vmem:[%s222 + $0x390] sm:$0xff]
      %v612 = vld [vmem:[%s222 + $0x398] sm:$0xff]
      %v613 = vld [vmem:[%s222 + $0x3a0] sm:$0xff]
      %v614 = vld [vmem:[%s222 + $0x3a8] sm:$0xff]
      %v615 = vld [vmem:[%s222 + $0x3b0] sm:$0xff]
      %v616 = vld [vmem:[%s222 + $0x3b8] sm:$0xff]
      %v617 = vld [vmem:[%s222 + $0x3c0] sm:$0xff]
      %v618 = vld [vmem:[%s222 + $0x3c8] sm:$0xff]
      %v619 = vld [vmem:[%s222 + $0x3d0] sm:$0xff]
      %v620 = vld [vmem:[%s222 + $0x3d8] sm:$0xff]
      %v621 = vld [vmem:[%s222 + $0x3e0] sm:$0xff]
      %v622 = vld [vmem:[%s222 + $0x3e8] sm:$0xff]
      %v623 = vld [vmem:[%s222 + $0x3f0] sm:$0xff]
      %v624 = vld [vmem:[%s222 + $0x3f8] sm:$0xff]
      %v625 = vld [vmem:[%s222 + $0x400] sm:$0xff]
      %v626 = vld [vmem:[%s222 + $0x408] sm:$0xff]
      %v627 = vld [vmem:[%s222 + $0x410] sm:$0xff]
      %v628 = vld [vmem:[%s222 + $0x418] sm:$0xff]
      %v629 = vld [vmem:[%s222 + $0x420] sm:$0xff]
      %v630 = vld [vmem:[%s222 + $0x428] sm:$0xff]
      %v631 = vld [vmem:[%s222 + $0x430] sm:$0xff]
      %v632 = vld [vmem:[%s222 + $0x438] sm:$0xff]
      %v633 = vld [vmem:[%s222 + $0x440] sm:$0xff]
      %v634 = vld [vmem:[%s222 + $0x448] sm:$0xff]
      %v635 = vld [vmem:[%s222 + $0x450] sm:$0xff]
      %v636 = vld [vmem:[%s222 + $0x458] sm:$0xff]
      %v637 = vld [vmem:[%s222 + $0x460] sm:$0xff]
      %v638 = vld [vmem:[%s222 + $0x468] sm:$0xff]
      %v639 = vld [vmem:[%s222 + $0x470] sm:$0xff]
      %v640 = vld [vmem:[%s222 + $0x478] sm:$0xff]
      %v641 = vld [vmem:[%s222 + $0x480] sm:$0xff]
      %v642 = vld [vmem:[%s222 + $0x488] sm:$0xff]
      %v643 = vld [vmem:[%s222 + $0x490] sm:$0xff]
      %v644 = vld [vmem:[%s222 + $0x498] sm:$0xff]
      %v645 = vld [vmem:[%s222 + $0x4a0] sm:$0xff]
      %v646 = vld [vmem:[%s222 + $0x4a8] sm:$0xff]
      %v647 = vld [vmem:[%s222 + $0x4b0] sm:$0xff]
      %v648 = vld [vmem:[%s222 + $0x4b8] sm:$0xff]
      %v649 = vld [vmem:[%s222 + $0x4c0] sm:$0xff]
      %v650 = vld [vmem:[%s222 + $0x4c8] sm:$0xff]
      %v651 = vld [vmem:[%s222 + $0x4d0] sm:$0xff]
      %v652 = vld [vmem:[%s222 + $0x4d8] sm:$0xff]
      %v653 = vld [vmem:[%s222 + $0x4e0] sm:$0xff]
      %v654 = vld [vmem:[%s222 + $0x4e8] sm:$0xff]
      %v655 = vld [vmem:[%s222 + $0x4f0] sm:$0xff]
      %v656 = vld [vmem:[%s222 + $0x4f8] sm:$0xff]
      %v657 = vld [vmem:[%s222 + $0x500] sm:$0xff]
      %v658 = vld [vmem:[%s222 + $0x508] sm:$0xff]
      %v659 = vld [vmem:[%s222 + $0x510] sm:$0xff]
      %v660 = vld [vmem:[%s222 + $0x518] sm:$0xff]
      %v661 = vld [vmem:[%s222 + $0x520] sm:$0xff]
      %v662 = vld [vmem:[%s222 + $0x528] sm:$0xff]
      %v663 = vld [vmem:[%s222 + $0x530] sm:$0xff]
      %v664 = vld [vmem:[%s222 + $0x538] sm:$0xff]
      %v665 = vld [vmem:[%s222 + $0x540] sm:$0xff]
      %v666 = vld [vmem:[%s222 + $0x548] sm:$0xff]
      %v667 = vld [vmem:[%s222 + $0x550] sm:$0xff]
      %v668 = vld [vmem:[%s222 + $0x558] sm:$0xff]
      %v669 = vld [vmem:[%s222 + $0x560] sm:$0xff]
      %v670 = vld [vmem:[%s222 + $0x568] sm:$0xff]
      %v671 = vld [vmem:[%s222 + $0x570] sm:$0xff]
      %v672 = vld [vmem:[%s222 + $0x578] sm:$0xff]
      %v673 = vld [vmem:[%s222 + $0x580] sm:$0xff]
      %v674 = vld [vmem:[%s222 + $0x588] sm:$0xff]
      %v675 = vld [vmem:[%s222 + $0x590] sm:$0xff]
      %v676 = vld [vmem:[%s222 + $0x598] sm:$0xff]
      %v677 = vld [vmem:[%s222 + $0x5a0] sm:$0xff]
      %v678 = vld [vmem:[%s222 + $0x5a8] sm:$0xff]
      %v679 = vld [vmem:[%s222 + $0x5b0] sm:$0xff]
      %v680 = vld [vmem:[%s222 + $0x5b8] sm:$0xff]
      %v681 = vld [vmem:[%s222 + $0x5c0] sm:$0xff]
      %v682 = vld [vmem:[%s222 + $0x5c8] sm:$0xff]
      %v683 = vld [vmem:[%s222 + $0x5d0] sm:$0xff]
      %v684 = vld [vmem:[%s222 + $0x5d8] sm:$0xff]
      %v685 = vld [vmem:[%s222 + $0x5e0] sm:$0xff]
      %v686 = vld [vmem:[%s222 + $0x5e8] sm:$0xff]
      %v687 = vld [vmem:[%s222 + $0x5f0] sm:$0xff]
      %v688 = vld [vmem:[%s222 + $0x5f8] sm:$0xff]
      %v689 = vld [vmem:[%s222 + $0x600] sm:$0xff]
      %v690 = vld [vmem:[%s222 + $0x608] sm:$0xff]
      %v691 = vld [vmem:[%s222 + $0x610] sm:$0xff]
      %v692 = vld [vmem:[%s222 + $0x618] sm:$0xff]
      %v693 = vld [vmem:[%s222 + $0x620] sm:$0xff]
      %v694 = vld [vmem:[%s222 + $0x628] sm:$0xff]
      %v695 = vld [vmem:[%s222 + $0x630] sm:$0xff]
      %v696 = vld [vmem:[%s222 + $0x638] sm:$0xff]
      %v697 = vld [vmem:[%s222 + $0x640] sm:$0xff]
      %v698 = vld [vmem:[%s222 + $0x648] sm:$0xff]
      %v699 = vld [vmem:[%s222 + $0x650] sm:$0xff]
      %v700 = vld [vmem:[%s222 + $0x658] sm:$0xff]
      %v701 = vld [vmem:[%s222 + $0x660] sm:$0xff]
      %v702 = vld [vmem:[%s222 + $0x668] sm:$0xff]
      %v703 = vld [vmem:[%s222 + $0x670] sm:$0xff]
      %v704 = vld [vmem:[%s222 + $0x678] sm:$0xff]
      %v705 = vld [vmem:[%s222 + $0x680] sm:$0xff]
      %v706 = vld [vmem:[%s222 + $0x688] sm:$0xff]
      %v707 = vld [vmem:[%s222 + $0x690] sm:$0xff]
      %v708 = vld [vmem:[%s222 + $0x698] sm:$0xff]
      %v709 = vld [vmem:[%s222 + $0x6a0] sm:$0xff]
      %v710 = vld [vmem:[%s222 + $0x6a8] sm:$0xff]
      %v711 = vld [vmem:[%s222 + $0x6b0] sm:$0xff]
      %v712 = vld [vmem:[%s222 + $0x6b8] sm:$0xff]
      %v713 = vld [vmem:[%s222 + $0x6c0] sm:$0xff]
      %v714 = vld [vmem:[%s222 + $0x6c8] sm:$0xff]
      %v715 = vld [vmem:[%s222 + $0x6d0] sm:$0xff]
      %v716 = vld [vmem:[%s222 + $0x6d8] sm:$0xff]
      %v717 = vld [vmem:[%s222 + $0x6e0] sm:$0xff]
      %v718 = vld [vmem:[%s222 + $0x6e8] sm:$0xff]
      %v719 = vld [vmem:[%s222 + $0x6f0] sm:$0xff]
      %v720 = vld [vmem:[%s222 + $0x6f8] sm:$0xff]
      %v721 = vld [vmem:[%s222 + $0x700] sm:$0xff]
      %v722 = vld [vmem:[%s222 + $0x708] sm:$0xff]
      %v723 = vld [vmem:[%s222 + $0x710] sm:$0xff]
      %v724 = vld [vmem:[%s222 + $0x718] sm:$0xff]
      %v725 = vld [vmem:[%s222 + $0x720] sm:$0xff]
      %v726 = vld [vmem:[%s222 + $0x728] sm:$0xff]
      %v727 = vld [vmem:[%s222 + $0x730] sm:$0xff]
      %v728 = vld [vmem:[%s222 + $0x738] sm:$0xff]
      %v729 = vld [vmem:[%s222 + $0x740] sm:$0xff]
      %v730 = vld [vmem:[%s222 + $0x748] sm:$0xff]
      %v731 = vld [vmem:[%s222 + $0x750] sm:$0xff]
      %v732 = vld [vmem:[%s222 + $0x758] sm:$0xff]
      %v733 = vld [vmem:[%s222 + $0x760] sm:$0xff]
      %v734 = vld [vmem:[%s222 + $0x768] sm:$0xff]
      %v735 = vld [vmem:[%s222 + $0x770] sm:$0xff]
      %v736 = vld [vmem:[%s222 + $0x778] sm:$0xff]
      %v737 = vld [vmem:[%s222 + $0x780] sm:$0xff]
      %v738 = vld [vmem:[%s222 + $0x788] sm:$0xff]
      %v739 = vld [vmem:[%s222 + $0x790] sm:$0xff]
      %v740 = vld [vmem:[%s222 + $0x798] sm:$0xff]
      %v741 = vld [vmem:[%s222 + $0x7a0] sm:$0xff]
      %v742 = vld [vmem:[%s222 + $0x7a8] sm:$0xff]
      %v743 = vld [vmem:[%s222 + $0x7b0] sm:$0xff]
      %v744 = vld [vmem:[%s222 + $0x7b8] sm:$0xff]
      %v745 = vld [vmem:[%s222 + $0x7c0] sm:$0xff]
      %v746 = vld [vmem:[%s222 + $0x7c8] sm:$0xff]
      %v747 = vld [vmem:[%s222 + $0x7d0] sm:$0xff]
      %v748 = vld [vmem:[%s222 + $0x7d8] sm:$0xff]
      %v749 = vld [vmem:[%s222 + $0x7e0] sm:$0xff]
      %v750 = vld [vmem:[%s222 + $0x7e8] sm:$0xff]
      %v751 = vld [vmem:[%s222 + $0x7f0] sm:$0xff]
      %v752 = vld [vmem:[%s222 + $0x7f8] sm:$0xff]
      %v753 = vadd.f32 %v241, %v497
      %v754 = vadd.f32 %v242, %v498
      %v755 = vadd.f32 %v243, %v499
      %v756 = vadd.f32 %v244, %v500
      %v757 = vadd.f32 %v245, %v501
      %v758 = vadd.f32 %v246, %v502
      %v759 = vadd.f32 %v247, %v503
      %v760 = vadd.f32 %v248, %v504
      %v761 = vadd.f32 %v249, %v505
      %v762 = vadd.f32 %v250, %v506
      %v763 = vadd.f32 %v251, %v507
      %v764 = vadd.f32 %v252, %v508
      %v765 = vadd.f32 %v253, %v509
      %v766 = vadd.f32 %v254, %v510
      %v767 = vadd.f32 %v255, %v511
      %v768 = vadd.f32 %v256, %v512
      %v769 = vadd.f32 %v257, %v513
      %v770 = vadd.f32 %v258, %v514
      %v771 = vadd.f32 %v259, %v515
      %v772 = vadd.f32 %v260, %v516
      %v773 = vadd.f32 %v261, %v517
      %v774 = vadd.f32 %v262, %v518
      %v775 = vadd.f32 %v263, %v519
      %v776 = vadd.f32 %v264, %v520
      %v777 = vadd.f32 %v265, %v521
      %v778 = vadd.f32 %v266, %v522
      %v779 = vadd.f32 %v267, %v523
      %v780 = vadd.f32 %v268, %v524
      %v781 = vadd.f32 %v269, %v525
      %v782 = vadd.f32 %v270, %v526
      %v783 = vadd.f32 %v271, %v527
      %v784 = vadd.f32 %v272, %v528
      %v785 = vadd.f32 %v273, %v529
      %v786 = vadd.f32 %v274, %v530
      %v787 = vadd.f32 %v275, %v531
      %v788 = vadd.f32 %v276, %v532
      %v789 = vadd.f32 %v277, %v533
      %v790 = vadd.f32 %v278, %v534
      %v791 = vadd.f32 %v279, %v535
      %v792 = vadd.f32 %v280, %v536
      %v793 = vadd.f32 %v281, %v537
      %v794 = vadd.f32 %v282, %v538
      %v795 = vadd.f32 %v283, %v539
      %v796 = vadd.f32 %v284, %v540
      %v797 = vadd.f32 %v285, %v541
      %v798 = vadd.f32 %v286, %v542
      %v799 = vadd.f32 %v287, %v543
      %v800 = vadd.f32 %v288, %v544
      %v801 = vadd.f32 %v289, %v545
      %v802 = vadd.f32 %v290, %v546
      %v803 = vadd.f32 %v291, %v547
      %v804 = vadd.f32 %v292, %v548
      %v805 = vadd.f32 %v293, %v549
      %v806 = vadd.f32 %v294, %v550
      %v807 = vadd.f32 %v295, %v551
      %v808 = vadd.f32 %v296, %v552
      %v809 = vadd.f32 %v297, %v553
      %v810 = vadd.f32 %v298, %v554
      %v811 = vadd.f32 %v299, %v555
      %v812 = vadd.f32 %v300, %v556
      %v813 = vadd.f32 %v301, %v557
      %v814 = vadd.f32 %v302, %v558
      %v815 = vadd.f32 %v303, %v559
      %v816 = vadd.f32 %v304, %v560
      %v817 = vadd.f32 %v305, %v561
      %v818 = vadd.f32 %v306, %v562
      %v819 = vadd.f32 %v307, %v563
      %v820 = vadd.f32 %v308, %v564
      %v821 = vadd.f32 %v309, %v565
      %v822 = vadd.f32 %v310, %v566
      %v823 = vadd.f32 %v311, %v567
      %v824 = vadd.f32 %v312, %v568
      %v825 = vadd.f32 %v313, %v569
      %v826 = vadd.f32 %v314, %v570
      %v827 = vadd.f32 %v315, %v571
      %v828 = vadd.f32 %v316, %v572
      %v829 = vadd.f32 %v317, %v573
      %v830 = vadd.f32 %v318, %v574
      %v831 = vadd.f32 %v319, %v575
      %v832 = vadd.f32 %v320, %v576
      %v833 = vadd.f32 %v321, %v577
      %v834 = vadd.f32 %v322, %v578
      %v835 = vadd.f32 %v323, %v579
      %v836 = vadd.f32 %v324, %v580
      %v837 = vadd.f32 %v325, %v581
      %v838 = vadd.f32 %v326, %v582
      %v839 = vadd.f32 %v327, %v583
      %v840 = vadd.f32 %v328, %v584
      %v841 = vadd.f32 %v329, %v585
      %v842 = vadd.f32 %v330, %v586
      %v843 = vadd.f32 %v331, %v587
      %v844 = vadd.f32 %v332, %v588
      %v845 = vadd.f32 %v333, %v589
      %v846 = vadd.f32 %v334, %v590
      %v847 = vadd.f32 %v335, %v591
      %v848 = vadd.f32 %v336, %v592
      %v849 = vadd.f32 %v337, %v593
      %v850 = vadd.f32 %v338, %v594
      %v851 = vadd.f32 %v339, %v595
      %v852 = vadd.f32 %v340, %v596
      %v853 = vadd.f32 %v341, %v597
      %v854 = vadd.f32 %v342, %v598
      %v855 = vadd.f32 %v343, %v599
      %v856 = vadd.f32 %v344, %v600
      %v857 = vadd.f32 %v345, %v601
      %v858 = vadd.f32 %v346, %v602
      %v859 = vadd.f32 %v347, %v603
      %v860 = vadd.f32 %v348, %v604
      %v861 = vadd.f32 %v349, %v605
      %v862 = vadd.f32 %v350, %v606
      %v863 = vadd.f32 %v351, %v607
      %v864 = vadd.f32 %v352, %v608
      %v865 = vadd.f32 %v353, %v609
      %v866 = vadd.f32 %v354, %v610
      %v867 = vadd.f32 %v355, %v611
      %v868 = vadd.f32 %v356, %v612
      %v869 = vadd.f32 %v357, %v613
      %v870 = vadd.f32 %v358, %v614
      %v871 = vadd.f32 %v359, %v615
      %v872 = vadd.f32 %v360, %v616
      %v873 = vadd.f32 %v361, %v617
      %v874 = vadd.f32 %v362, %v618
      %v875 = vadd.f32 %v363, %v619
      %v876 = vadd.f32 %v364, %v620
      %v877 = vadd.f32 %v365, %v621
      %v878 = vadd.f32 %v366, %v622
      %v879 = vadd.f32 %v367, %v623
      %v880 = vadd.f32 %v368, %v624
      %v881 = vadd.f32 %v369, %v625
      %v882 = vadd.f32 %v370, %v626
      %v883 = vadd.f32 %v371, %v627
      %v884 = vadd.f32 %v372, %v628
      %v885 = vadd.f32 %v373, %v629
      %v886 = vadd.f32 %v374, %v630
      %v887 = vadd.f32 %v375, %v631
      %v888 = vadd.f32 %v376, %v632
      %v889 = vadd.f32 %v377, %v633
      %v890 = vadd.f32 %v378, %v634
      %v891 = vadd.f32 %v379, %v635
      %v892 = vadd.f32 %v380, %v636
      %v893 = vadd.f32 %v381, %v637
      %v894 = vadd.f32 %v382, %v638
      %v895 = vadd.f32 %v383, %v639
      %v896 = vadd.f32 %v384, %v640
      %v897 = vadd.f32 %v385, %v641
      %v898 = vadd.f32 %v386, %v642
      %v899 = vadd.f32 %v387, %v643
      %v900 = vadd.f32 %v388, %v644
      %v901 = vadd.f32 %v389, %v645
      %v902 = vadd.f32 %v390, %v646
      %v903 = vadd.f32 %v391, %v647
      %v904 = vadd.f32 %v392, %v648
      %v905 = vadd.f32 %v393, %v649
      %v906 = vadd.f32 %v394, %v650
      %v907 = vadd.f32 %v395, %v651
      %v908 = vadd.f32 %v396, %v652
      %v909 = vadd.f32 %v397, %v653
      %v910 = vadd.f32 %v398, %v654
      %v911 = vadd.f32 %v399, %v655
      %v912 = vadd.f32 %v400, %v656
      %v913 = vadd.f32 %v401, %v657
      %v914 = vadd.f32 %v402, %v658
      %v915 = vadd.f32 %v403, %v659
      %v916 = vadd.f32 %v404, %v660
      %v917 = vadd.f32 %v405, %v661
      %v918 = vadd.f32 %v406, %v662
      %v919 = vadd.f32 %v407, %v663
      %v920 = vadd.f32 %v408, %v664
      %v921 = vadd.f32 %v409, %v665
      %v922 = vadd.f32 %v410, %v666
      %v923 = vadd.f32 %v411, %v667
      %v924 = vadd.f32 %v412, %v668
      %v925 = vadd.f32 %v413, %v669
      %v926 = vadd.f32 %v414, %v670
      %v927 = vadd.f32 %v415, %v671
      %v928 = vadd.f32 %v416, %v672
      %v929 = vadd.f32 %v417, %v673
      %v930 = vadd.f32 %v418, %v674
      %v931 = vadd.f32 %v419, %v675
      %v932 = vadd.f32 %v420, %v676
      %v933 = vadd.f32 %v421, %v677
      %v934 = vadd.f32 %v422, %v678
      %v935 = vadd.f32 %v423, %v679
      %v936 = vadd.f32 %v424, %v680
      %v937 = vadd.f32 %v425, %v681
      %v938 = vadd.f32 %v426, %v682
      %v939 = vadd.f32 %v427, %v683
      %v940 = vadd.f32 %v428, %v684
      %v941 = vadd.f32 %v429, %v685
      %v942 = vadd.f32 %v430, %v686
      %v943 = vadd.f32 %v431, %v687
      %v944 = vadd.f32 %v432, %v688
      %v945 = vadd.f32 %v433, %v689
      %v946 = vadd.f32 %v434, %v690
      %v947 = vadd.f32 %v435, %v691
      %v948 = vadd.f32 %v436, %v692
      %v949 = vadd.f32 %v437, %v693
      %v950 = vadd.f32 %v438, %v694
      %v951 = vadd.f32 %v439, %v695
      %v952 = vadd.f32 %v440, %v696
      %v953 = vadd.f32 %v441, %v697
      %v954 = vadd.f32 %v442, %v698
      %v955 = vadd.f32 %v443, %v699
      %v956 = vadd.f32 %v444, %v700
      %v957 = vadd.f32 %v445, %v701
      %v958 = vadd.f32 %v446, %v702
      %v959 = vadd.f32 %v447, %v703
      %v960 = vadd.f32 %v448, %v704
      %v961 = vadd.f32 %v449, %v705
      %v962 = vadd.f32 %v450, %v706
      %v963 = vadd.f32 %v451, %v707
      %v964 = vadd.f32 %v452, %v708
      %v965 = vadd.f32 %v453, %v709
      %v966 = vadd.f32 %v454, %v710
      %v967 = vadd.f32 %v455, %v711
      %v968 = vadd.f32 %v456, %v712
      %v969 = vadd.f32 %v457, %v713
      %v970 = vadd.f32 %v458, %v714
      %v971 = vadd.f32 %v459, %v715
      %v972 = vadd.f32 %v460, %v716
      %v973 = vadd.f32 %v461, %v717
      %v974 = vadd.f32 %v462, %v718
      %v975 = vadd.f32 %v463, %v719
      %v976 = vadd.f32 %v464, %v720
      %v977 = vadd.f32 %v465, %v721
      %v978 = vadd.f32 %v466, %v722
      %v979 = vadd.f32 %v467, %v723
      %v980 = vadd.f32 %v468, %v724
      %v981 = vadd.f32 %v469, %v725
      %v982 = vadd.f32 %v470, %v726
      %v983 = vadd.f32 %v471, %v727
      %v984 = vadd.f32 %v472, %v728
      %v985 = vadd.f32 %v473, %v729
      %v986 = vadd.f32 %v474, %v730
      %v987 = vadd.f32 %v475, %v731
      %v988 = vadd.f32 %v476, %v732
      %v989 = vadd.f32 %v477, %v733
      %v990 = vadd.f32 %v478, %v734
      %v991 = vadd.f32 %v479, %v735
      %v992 = vadd.f32 %v480, %v736
      %v993 = vadd.f32 %v481, %v737
      %v994 = vadd.f32 %v482, %v738
      %v995 = vadd.f32 %v483, %v739
      %v996 = vadd.f32 %v484, %v740
      %v997 = vadd.f32 %v485, %v741
      %v998 = vadd.f32 %v486, %v742
      %v999 = vadd.f32 %v487, %v743
      %v1000 = vadd.f32 %v488, %v744
      %v1001 = vadd.f32 %v489, %v745
      %v1002 = vadd.f32 %v490, %v746
      %v1003 = vadd.f32 %v491, %v747
      %v1004 = vadd.f32 %v492, %v748
      %v1005 = vadd.f32 %v493, %v749
      %v1006 = vadd.f32 %v494, %v750
      %v1007 = vadd.f32 %v495, %v751
      %v1008 = vadd.f32 %v496, %v752
      %v1009 = vmax.f32 %v753, 0.0
      %v1010 = vmax.f32 %v754, 0.0
      %v1011 = vmax.f32 %v755, 0.0
      %v1012 = vmax.f32 %v756, 0.0
      %v1013 = vmax.f32 %v757, 0.0
      %v1014 = vmax.f32 %v758, 0.0
      %v1015 = vmax.f32 %v759, 0.0
      %v1016 = vmax.f32 %v760, 0.0
      %v1017 = vmax.f32 %v761, 0.0
      %v1018 = vmax.f32 %v762, 0.0
      %v1019 = vmax.f32 %v763, 0.0
      %v1020 = vmax.f32 %v764, 0.0
      %v1021 = vmax.f32 %v765, 0.0
      %v1022 = vmax.f32 %v766, 0.0
      %v1023 = vmax.f32 %v767, 0.0
      %v1024 = vmax.f32 %v768, 0.0
      %v1025 = vmax.f32 %v769, 0.0
      %v1026 = vmax.f32 %v770, 0.0
      %v1027 = vmax.f32 %v771, 0.0
      %v1028 = vmax.f32 %v772, 0.0
      %v1029 = vmax.f32 %v773, 0.0
      %v1030 = vmax.f32 %v774, 0.0
      %v1031 = vmax.f32 %v775, 0.0
      %v1032 = vmax.f32 %v776, 0.0
      %v1033 = vmax.f32 %v777, 0.0
      %v1034 = vmax.f32 %v778, 0.0
      %v1035 = vmax.f32 %v779, 0.0
      %v1036 = vmax.f32 %v780, 0.0
      %v1037 = vmax.f32 %v781, 0.0
      %v1038 = vmax.f32 %v782, 0.0
      %v1039 = vmax.f32 %v783, 0.0
      %v1040 = vmax.f32 %v784, 0.0
      %v1041 = vmax.f32 %v785, 0.0
      %v1042 = vmax.f32 %v786, 0.0
      %v1043 = vmax.f32 %v787, 0.0
      %v1044 = vmax.f32 %v788, 0.0
      %v1045 = vmax.f32 %v789, 0.0
      %v1046 = vmax.f32 %v790, 0.0
      %v1047 = vmax.f32 %v791, 0.0
      %v1048 = vmax.f32 %v792, 0.0
      %v1049 = vmax.f32 %v793, 0.0
      %v1050 = vmax.f32 %v794, 0.0
      %v1051 = vmax.f32 %v795, 0.0
      %v1052 = vmax.f32 %v796, 0.0
      %v1053 = vmax.f32 %v797, 0.0
      %v1054 = vmax.f32 %v798, 0.0
      %v1055 = vmax.f32 %v799, 0.0
      %v1056 = vmax.f32 %v800, 0.0
      %v1057 = vmax.f32 %v801, 0.0
      %v1058 = vmax.f32 %v802, 0.0
      %v1059 = vmax.f32 %v803, 0.0
      %v1060 = vmax.f32 %v804, 0.0
      %v1061 = vmax.f32 %v805, 0.0
      %v1062 = vmax.f32 %v806, 0.0
      %v1063 = vmax.f32 %v807, 0.0
      %v1064 = vmax.f32 %v808, 0.0
      %v1065 = vmax.f32 %v809, 0.0
      %v1066 = vmax.f32 %v810, 0.0
      %v1067 = vmax.f32 %v811, 0.0
      %v1068 = vmax.f32 %v812, 0.0
      %v1069 = vmax.f32 %v813, 0.0
      %v1070 = vmax.f32 %v814, 0.0
      %v1071 = vmax.f32 %v815, 0.0
      %v1072 = vmax.f32 %v816, 0.0
      %v1073 = vmax.f32 %v817, 0.0
      %v1074 = vmax.f32 %v818, 0.0
      %v1075 = vmax.f32 %v819, 0.0
      %v1076 = vmax.f32 %v820, 0.0
      %v1077 = vmax.f32 %v821, 0.0
      %v1078 = vmax.f32 %v822, 0.0
      %v1079 = vmax.f32 %v823, 0.0
      %v1080 = vmax.f32 %v824, 0.0
      %v1081 = vmax.f32 %v825, 0.0
      %v1082 = vmax.f32 %v826, 0.0
      %v1083 = vmax.f32 %v827, 0.0
      %v1084 = vmax.f32 %v828, 0.0
      %v1085 = vmax.f32 %v829, 0.0
      %v1086 = vmax.f32 %v830, 0.0
      %v1087 = vmax.f32 %v831, 0.0
      %v1088 = vmax.f32 %v832, 0.0
      %v1089 = vmax.f32 %v833, 0.0
      %v1090 = vmax.f32 %v834, 0.0
      %v1091 = vmax.f32 %v835, 0.0
      %v1092 = vmax.f32 %v836, 0.0
      %v1093 = vmax.f32 %v837, 0.0
      %v1094 = vmax.f32 %v838, 0.0
      %v1095 = vmax.f32 %v839, 0.0
      %v1096 = vmax.f32 %v840, 0.0
      %v1097 = vmax.f32 %v841, 0.0
      %v1098 = vmax.f32 %v842, 0.0
      %v1099 = vmax.f32 %v843, 0.0
      %v1100 = vmax.f32 %v844, 0.0
      %v1101 = vmax.f32 %v845, 0.0
      %v1102 = vmax.f32 %v846, 0.0
      %v1103 = vmax.f32 %v847, 0.0
      %v1104 = vmax.f32 %v848, 0.0
      %v1105 = vmax.f32 %v849, 0.0
      %v1106 = vmax.f32 %v850, 0.0
      %v1107 = vmax.f32 %v851, 0.0
      %v1108 = vmax.f32 %v852, 0.0
      %v1109 = vmax.f32 %v853, 0.0
      %v1110 = vmax.f32 %v854, 0.0
      %v1111 = vmax.f32 %v855, 0.0
      %v1112 = vmax.f32 %v856, 0.0
      %v1113 = vmax.f32 %v857, 0.0
      %v1114 = vmax.f32 %v858, 0.0
      %v1115 = vmax.f32 %v859, 0.0
      %v1116 = vmax.f32 %v860, 0.0
      %v1117 = vmax.f32 %v861, 0.0
      %v1118 = vmax.f32 %v862, 0.0
      %v1119 = vmax.f32 %v863, 0.0
      %v1120 = vmax.f32 %v864, 0.0
      %v1121 = vmax.f32 %v865, 0.0
      %v1122 = vmax.f32 %v866, 0.0
      %v1123 = vmax.f32 %v867, 0.0
      %v1124 = vmax.f32 %v868, 0.0
      %v1125 = vmax.f32 %v869, 0.0
      %v1126 = vmax.f32 %v870, 0.0
      %v1127 = vmax.f32 %v871, 0.0
      %v1128 = vmax.f32 %v872, 0.0
      %v1129 = vmax.f32 %v873, 0.0
      %v1130 = vmax.f32 %v874, 0.0
      %v1131 = vmax.f32 %v875, 0.0
      %v1132 = vmax.f32 %v876, 0.0
      %v1133 = vmax.f32 %v877, 0.0
      %v1134 = vmax.f32 %v878, 0.0
      %v1135 = vmax.f32 %v879, 0.0
      %v1136 = vmax.f32 %v880, 0.0
      %v1137 = vmax.f32 %v881, 0.0
      %v1138 = vmax.f32 %v882, 0.0
      %v1139 = vmax.f32 %v883, 0.0
      %v1140 = vmax.f32 %v884, 0.0
      %v1141 = vmax.f32 %v885, 0.0
      %v1142 = vmax.f32 %v886, 0.0
      %v1143 = vmax.f32 %v887, 0.0
      %v1144 = vmax.f32 %v888, 0.0
      %v1145 = vmax.f32 %v889, 0.0
      %v1146 = vmax.f32 %v890, 0.0
      %v1147 = vmax.f32 %v891, 0.0
      %v1148 = vmax.f32 %v892, 0.0
      %v1149 = vmax.f32 %v893, 0.0
      %v1150 = vmax.f32 %v894, 0.0
      %v1151 = vmax.f32 %v895, 0.0
      %v1152 = vmax.f32 %v896, 0.0
      %v1153 = vmax.f32 %v897, 0.0
      %v1154 = vmax.f32 %v898, 0.0
      %v1155 = vmax.f32 %v899, 0.0
      %v1156 = vmax.f32 %v900, 0.0
      %v1157 = vmax.f32 %v901, 0.0
      %v1158 = vmax.f32 %v902, 0.0
      %v1159 = vmax.f32 %v903, 0.0
      %v1160 = vmax.f32 %v904, 0.0
      %v1161 = vmax.f32 %v905, 0.0
      %v1162 = vmax.f32 %v906, 0.0
      %v1163 = vmax.f32 %v907, 0.0
      %v1164 = vmax.f32 %v908, 0.0
      %v1165 = vmax.f32 %v909, 0.0
      %v1166 = vmax.f32 %v910, 0.0
      %v1167 = vmax.f32 %v911, 0.0
      %v1168 = vmax.f32 %v912, 0.0
      %v1169 = vmax.f32 %v913, 0.0
      %v1170 = vmax.f32 %v914, 0.0
      %v1171 = vmax.f32 %v915, 0.0
      %v1172 = vmax.f32 %v916, 0.0
      %v1173 = vmax.f32 %v917, 0.0
      %v1174 = vmax.f32 %v918, 0.0
      %v1175 = vmax.f32 %v919, 0.0
      %v1176 = vmax.f32 %v920, 0.0
      %v1177 = vmax.f32 %v921, 0.0
      %v1178 = vmax.f32 %v922, 0.0
      %v1179 = vmax.f32 %v923, 0.0
      %v1180 = vmax.f32 %v924, 0.0
      %v1181 = vmax.f32 %v925, 0.0
      %v1182 = vmax.f32 %v926, 0.0
      %v1183 = vmax.f32 %v927, 0.0
      %v1184 = vmax.f32 %v928, 0.0
      %v1185 = vmax.f32 %v929, 0.0
      %v1186 = vmax.f32 %v930, 0.0
      %v1187 = vmax.f32 %v931, 0.0
      %v1188 = vmax.f32 %v932, 0.0
      %v1189 = vmax.f32 %v933, 0.0
      %v1190 = vmax.f32 %v934, 0.0
      %v1191 = vmax.f32 %v935, 0.0
      %v1192 = vmax.f32 %v936, 0.0
      %v1193 = vmax.f32 %v937, 0.0
      %v1194 = vmax.f32 %v938, 0.0
      %v1195 = vmax.f32 %v939, 0.0
      %v1196 = vmax.f32 %v940, 0.0
      %v1197 = vmax.f32 %v941, 0.0
      %v1198 = vmax.f32 %v942, 0.0
      %v1199 = vmax.f32 %v943, 0.0
      %v1200 = vmax.f32 %v944, 0.0
      %v1201 = vmax.f32 %v945, 0.0
      %v1202 = vmax.f32 %v946, 0.0
      %v1203 = vmax.f32 %v947, 0.0
      %v1204 = vmax.f32 %v948, 0.0
      %v1205 = vmax.f32 %v949, 0.0
      %v1206 = vmax.f32 %v950, 0.0
      %v1207 = vmax.f32 %v951, 0.0
      %v1208 = vmax.f32 %v952, 0.0
      %v1209 = vmax.f32 %v953, 0.0
      %v1210 = vmax.f32 %v954, 0.0
      %v1211 = vmax.f32 %v955, 0.0
      %v1212 = vmax.f32 %v956, 0.0
      %v1213 = vmax.f32 %v957, 0.0
      %v1214 = vmax.f32 %v958, 0.0
      %v1215 = vmax.f32 %v959, 0.0
      %v1216 = vmax.f32 %v960, 0.0
      %v1217 = vmax.f32 %v961, 0.0
      %v1218 = vmax.f32 %v962, 0.0
      %v1219 = vmax.f32 %v963, 0.0
      %v1220 = vmax.f32 %v964, 0.0
      %v1221 = vmax.f32 %v965, 0.0
      %v1222 = vmax.f32 %v966, 0.0
      %v1223 = vmax.f32 %v967, 0.0
      %v1224 = vmax.f32 %v968, 0.0
      %v1225 = vmax.f32 %v969, 0.0
      %v1226 = vmax.f32 %v970, 0.0
      %v1227 = vmax.f32 %v971, 0.0
      %v1228 = vmax.f32 %v972, 0.0
      %v1229 = vmax.f32 %v973, 0.0
      %v1230 = vmax.f32 %v974, 0.0
      %v1231 = vmax.f32 %v975, 0.0
      %v1232 = vmax.f32 %v976, 0.0
      %v1233 = vmax.f32 %v977, 0.0
      %v1234 = vmax.f32 %v978, 0.0
      %v1235 = vmax.f32 %v979, 0.0
      %v1236 = vmax.f32 %v980, 0.0
      %v1237 = vmax.f32 %v981, 0.0
      %v1238 = vmax.f32 %v982, 0.0
      %v1239 = vmax.f32 %v983, 0.0
      %v1240 = vmax.f32 %v984, 0.0
      %v1241 = vmax.f32 %v985, 0.0
      %v1242 = vmax.f32 %v986, 0.0
      %v1243 = vmax.f32 %v987, 0.0
      %v1244 = vmax.f32 %v988, 0.0
      %v1245 = vmax.f32 %v989, 0.0
      %v1246 = vmax.f32 %v990, 0.0
      %v1247 = vmax.f32 %v991, 0.0
      %v1248 = vmax.f32 %v992, 0.0
      %v1249 = vmax.f32 %v993, 0.0
      %v1250 = vmax.f32 %v994, 0.0
      %v1251 = vmax.f32 %v995, 0.0
      %v1252 = vmax.f32 %v996, 0.0
      %v1253 = vmax.f32 %v997, 0.0
      %v1254 = vmax.f32 %v998, 0.0
      %v1255 = vmax.f32 %v999, 0.0
      %v1256 = vmax.f32 %v1000, 0.0
      %v1257 = vmax.f32 %v1001, 0.0
      %v1258 = vmax.f32 %v1002, 0.0
      %v1259 = vmax.f32 %v1003, 0.0
      %v1260 = vmax.f32 %v1004, 0.0
      %v1261 = vmax.f32 %v1005, 0.0
      %v1262 = vmax.f32 %v1006, 0.0
      %v1263 = vmax.f32 %v1007, 0.0
      %v1264 = vmax.f32 %v1008, 0.0
      %v1265 = vpack.c.bf16 %v1011, %v1009
      %v1266 = vpack.c.bf16 %v1012, %v1010
      %v1267 = vpack.c.bf16 %v1015, %v1013
      %v1268 = vpack.c.bf16 %v1016, %v1014
      %v1269 = vpack.c.bf16 %v1019, %v1017
      %v1270 = vpack.c.bf16 %v1020, %v1018
      %v1271 = vpack.c.bf16 %v1023, %v1021
      %v1272 = vpack.c.bf16 %v1024, %v1022
      %v1273 = vpack.c.bf16 %v1027, %v1025
      %v1274 = vpack.c.bf16 %v1028, %v1026
      %v1275 = vpack.c.bf16 %v1031, %v1029
      %v1276 = vpack.c.bf16 %v1032, %v1030
      %v1277 = vpack.c.bf16 %v1035, %v1033
      %v1278 = vpack.c.bf16 %v1036, %v1034
      %v1279 = vpack.c.bf16 %v1039, %v1037
      %v1280 = vpack.c.bf16 %v1040, %v1038
      %v1281 = vpack.c.bf16 %v1043, %v1041
      %v1282 = vpack.c.bf16 %v1044, %v1042
      %v1283 = vpack.c.bf16 %v1047, %v1045
      %v1284 = vpack.c.bf16 %v1048, %v1046
      %v1285 = vpack.c.bf16 %v1051, %v1049
      %v1286 = vpack.c.bf16 %v1052, %v1050
      %v1287 = vpack.c.bf16 %v1055, %v1053
      %v1288 = vpack.c.bf16 %v1056, %v1054
      %v1289 = vpack.c.bf16 %v1059, %v1057
      %v1290 = vpack.c.bf16 %v1060, %v1058
      %v1291 = vpack.c.bf16 %v1063, %v1061
      %v1292 = vpack.c.bf16 %v1064, %v1062
      %v1293 = vpack.c.bf16 %v1067, %v1065
      %v1294 = vpack.c.bf16 %v1068, %v1066
      %v1295 = vpack.c.bf16 %v1071, %v1069
      %v1296 = vpack.c.bf16 %v1072, %v1070
      %v1297 = vpack.c.bf16 %v1075, %v1073
      %v1298 = vpack.c.bf16 %v1076, %v1074
      %v1299 = vpack.c.bf16 %v1079, %v1077
      %v1300 = vpack.c.bf16 %v1080, %v1078
      %v1301 = vpack.c.bf16 %v1083, %v1081
      %v1302 = vpack.c.bf16 %v1084, %v1082
      %v1303 = vpack.c.bf16 %v1087, %v1085
      %v1304 = vpack.c.bf16 %v1088, %v1086
      %v1305 = vpack.c.bf16 %v1091, %v1089
      %v1306 = vpack.c.bf16 %v1092, %v1090
      %v1307 = vpack.c.bf16 %v1095, %v1093
      %v1308 = vpack.c.bf16 %v1096, %v1094
      %v1309 = vpack.c.bf16 %v1099, %v1097
      %v1310 = vpack.c.bf16 %v1100, %v1098
      %v1311 = vpack.c.bf16 %v1103, %v1101
      %v1312 = vpack.c.bf16 %v1104, %v1102
      %v1313 = vpack.c.bf16 %v1107, %v1105
      %v1314 = vpack.c.bf16 %v1108, %v1106
      %v1315 = vpack.c.bf16 %v1111, %v1109
      %v1316 = vpack.c.bf16 %v1112, %v1110
      %v1317 = vpack.c.bf16 %v1115, %v1113
      %v1318 = vpack.c.bf16 %v1116, %v1114
      %v1319 = vpack.c.bf16 %v1119, %v1117
      %v1320 = vpack.c.bf16 %v1120, %v1118
      %v1321 = vpack.c.bf16 %v1123, %v1121
      %v1322 = vpack.c.bf16 %v1124, %v1122
      %v1323 = vpack.c.bf16 %v1127, %v1125
      %v1324 = vpack.c.bf16 %v1128, %v1126
      %v1325 = vpack.c.bf16 %v1131, %v1129
      %v1326 = vpack.c.bf16 %v1132, %v1130
      %v1327 = vpack.c.bf16 %v1135, %v1133
      %v1328 = vpack.c.bf16 %v1136, %v1134
      %v1329 = vpack.c.bf16 %v1139, %v1137
      %v1330 = vpack.c.bf16 %v1140, %v1138
      %v1331 = vpack.c.bf16 %v1143, %v1141
      %v1332 = vpack.c.bf16 %v1144, %v1142
      %v1333 = vpack.c.bf16 %v1147, %v1145
      %v1334 = vpack.c.bf16 %v1148, %v1146
      %v1335 = vpack.c.bf16 %v1151, %v1149
      %v1336 = vpack.c.bf16 %v1152, %v1150
      %v1337 = vpack.c.bf16 %v1155, %v1153
      %v1338 = vpack.c.bf16 %v1156, %v1154
      %v1339 = vpack.c.bf16 %v1159, %v1157
      %v1340 = vpack.c.bf16 %v1160, %v1158
      %v1341 = vpack.c.bf16 %v1163, %v1161
      %v1342 = vpack.c.bf16 %v1164, %v1162
      %v1343 = vpack.c.bf16 %v1167, %v1165
      %v1344 = vpack.c.bf16 %v1168, %v1166
      %v1345 = vpack.c.bf16 %v1171, %v1169
      %v1346 = vpack.c.bf16 %v1172, %v1170
      %v1347 = vpack.c.bf16 %v1175, %v1173
      %v1348 = vpack.c.bf16 %v1176, %v1174
      %v1349 = vpack.c.bf16 %v1179, %v1177
      %v1350 = vpack.c.bf16 %v1180, %v1178
      %v1351 = vpack.c.bf16 %v1183, %v1181
      %v1352 = vpack.c.bf16 %v1184, %v1182
      %v1353 = vpack.c.bf16 %v1187, %v1185
      %v1354 = vpack.c.bf16 %v1188, %v1186
      %v1355 = vpack.c.bf16 %v1191, %v1189
      %v1356 = vpack.c.bf16 %v1192, %v1190
      %v1357 = vpack.c.bf16 %v1195, %v1193
      %v1358 = vpack.c.bf16 %v1196, %v1194
      %v1359 = vpack.c.bf16 %v1199, %v1197
      %v1360 = vpack.c.bf16 %v1200, %v1198
      %v1361 = vpack.c.bf16 %v1203, %v1201
      %v1362 = vpack.c.bf16 %v1204, %v1202
      %v1363 = vpack.c.bf16 %v1207, %v1205
      %v1364 = vpack.c.bf16 %v1208, %v1206
      %v1365 = vpack.c.bf16 %v1211, %v1209
      %v1366 = vpack.c.bf16 %v1212, %v1210
      %v1367 = vpack.c.bf16 %v1215, %v1213
      %v1368 = vpack.c.bf16 %v1216, %v1214
      %v1369 = vpack.c.bf16 %v1219, %v1217
      %v1370 = vpack.c.bf16 %v1220, %v1218
      %v1371 = vpack.c.bf16 %v1223, %v1221
      %v1372 = vpack.c.bf16 %v1224, %v1222
      %v1373 = vpack.c.bf16 %v1227, %v1225
      %v1374 = vpack.c.bf16 %v1228, %v1226
      %v1375 = vpack.c.bf16 %v1231, %v1229
      %v1376 = vpack.c.bf16 %v1232, %v1230
      %v1377 = vpack.c.bf16 %v1235, %v1233
      %v1378 = vpack.c.bf16 %v1236, %v1234
      %v1379 = vpack.c.bf16 %v1239, %v1237
      %v1380 = vpack.c.bf16 %v1240, %v1238
      %v1381 = vpack.c.bf16 %v1243, %v1241
      %v1382 = vpack.c.bf16 %v1244, %v1242
      %v1383 = vpack.c.bf16 %v1247, %v1245
      %v1384 = vpack.c.bf16 %v1248, %v1246
      %v1385 = vpack.c.bf16 %v1251, %v1249
      %v1386 = vpack.c.bf16 %v1252, %v1250
      %v1387 = vpack.c.bf16 %v1255, %v1253
      %v1388 = vpack.c.bf16 %v1256, %v1254
      %v1389 = vpack.c.bf16 %v1259, %v1257
      %v1390 = vpack.c.bf16 %v1260, %v1258
      %v1391 = vpack.c.bf16 %v1263, %v1261
      %v1392 = vpack.c.bf16 %v1264, %v1262
      %v1393 = vld [vmem:[%s228] sm:$0xff]
      %v1394 = vld [vmem:[%s228 + $0x8] sm:$0xff]
      %v1395 = vld [vmem:[%s228 + $0x10] sm:$0xff]
      %v1396 = vld [vmem:[%s228 + $0x18] sm:$0xff]
      %v1397 = vld [vmem:[%s228 + $0x20] sm:$0xff]
      %v1398 = vld [vmem:[%s228 + $0x28] sm:$0xff]
      %v1399 = vld [vmem:[%s228 + $0x30] sm:$0xff]
      %v1400 = vld [vmem:[%s228 + $0x38] sm:$0xff]
      %v1401 = vld [vmem:[%s228 + $0x40] sm:$0xff]
      %v1402 = vld [vmem:[%s228 + $0x48] sm:$0xff]
      %v1403 = vld [vmem:[%s228 + $0x50] sm:$0xff]
      %v1404 = vld [vmem:[%s228 + $0x58] sm:$0xff]
      %v1405 = vld [vmem:[%s228 + $0x60] sm:$0xff]
      %v1406 = vld [vmem:[%s228 + $0x68] sm:$0xff]
      %v1407 = vld [vmem:[%s228 + $0x70] sm:$0xff]
      %v1408 = vld [vmem:[%s228 + $0x78] sm:$0xff]
      %v1409 = vld [vmem:[%s228 + $0x80] sm:$0xff]
      %v1410 = vld [vmem:[%s228 + $0x88] sm:$0xff]
      %v1411 = vld [vmem:[%s228 + $0x90] sm:$0xff]
      %v1412 = vld [vmem:[%s228 + $0x98] sm:$0xff]
      %v1413 = vld [vmem:[%s228 + $0xa0] sm:$0xff]
      %v1414 = vld [vmem:[%s228 + $0xa8] sm:$0xff]
      %v1415 = vld [vmem:[%s228 + $0xb0] sm:$0xff]
      %v1416 = vld [vmem:[%s228 + $0xb8] sm:$0xff]
      %v1417 = vld [vmem:[%s228 + $0xc0] sm:$0xff]
      %v1418 = vld [vmem:[%s228 + $0xc8] sm:$0xff]
      %v1419 = vld [vmem:[%s228 + $0xd0] sm:$0xff]
      %v1420 = vld [vmem:[%s228 + $0xd8] sm:$0xff]
      %v1421 = vld [vmem:[%s228 + $0xe0] sm:$0xff]
      %v1422 = vld [vmem:[%s228 + $0xe8] sm:$0xff]
      %v1423 = vld [vmem:[%s228 + $0xf0] sm:$0xff]
      %v1424 = vld [vmem:[%s228 + $0xf8] sm:$0xff]
      %v1425 = vld [vmem:[%s228 + $0x100] sm:$0xff]
      %v1426 = vld [vmem:[%s228 + $0x108] sm:$0xff]
      %v1427 = vld [vmem:[%s228 + $0x110] sm:$0xff]
      %v1428 = vld [vmem:[%s228 + $0x118] sm:$0xff]
      %v1429 = vld [vmem:[%s228 + $0x120] sm:$0xff]
      %v1430 = vld [vmem:[%s228 + $0x128] sm:$0xff]
      %v1431 = vld [vmem:[%s228 + $0x130] sm:$0xff]
      %v1432 = vld [vmem:[%s228 + $0x138] sm:$0xff]
      %v1433 = vld [vmem:[%s228 + $0x140] sm:$0xff]
      %v1434 = vld [vmem:[%s228 + $0x148] sm:$0xff]
      %v1435 = vld [vmem:[%s228 + $0x150] sm:$0xff]
      %v1436 = vld [vmem:[%s228 + $0x158] sm:$0xff]
      %v1437 = vld [vmem:[%s228 + $0x160] sm:$0xff]
      %v1438 = vld [vmem:[%s228 + $0x168] sm:$0xff]
      %v1439 = vld [vmem:[%s228 + $0x170] sm:$0xff]
      %v1440 = vld [vmem:[%s228 + $0x178] sm:$0xff]
      %v1441 = vld [vmem:[%s228 + $0x180] sm:$0xff]
      %v1442 = vld [vmem:[%s228 + $0x188] sm:$0xff]
      %v1443 = vld [vmem:[%s228 + $0x190] sm:$0xff]
      %v1444 = vld [vmem:[%s228 + $0x198] sm:$0xff]
      %v1445 = vld [vmem:[%s228 + $0x1a0] sm:$0xff]
      %v1446 = vld [vmem:[%s228 + $0x1a8] sm:$0xff]
      %v1447 = vld [vmem:[%s228 + $0x1b0] sm:$0xff]
      %v1448 = vld [vmem:[%s228 + $0x1b8] sm:$0xff]
      %v1449 = vld [vmem:[%s228 + $0x1c0] sm:$0xff]
      %v1450 = vld [vmem:[%s228 + $0x1c8] sm:$0xff]
      %v1451 = vld [vmem:[%s228 + $0x1d0] sm:$0xff]
      %v1452 = vld [vmem:[%s228 + $0x1d8] sm:$0xff]
      %v1453 = vld [vmem:[%s228 + $0x1e0] sm:$0xff]
      %v1454 = vld [vmem:[%s228 + $0x1e8] sm:$0xff]
      %v1455 = vld [vmem:[%s228 + $0x1f0] sm:$0xff]
      %v1456 = vld [vmem:[%s228 + $0x1f8] sm:$0xff]
      %v1457 = vld [vmem:[%s228 + $0x200] sm:$0xff]
      %v1458 = vld [vmem:[%s228 + $0x208] sm:$0xff]
      %v1459 = vld [vmem:[%s228 + $0x210] sm:$0xff]
      %v1460 = vld [vmem:[%s228 + $0x218] sm:$0xff]
      %v1461 = vld [vmem:[%s228 + $0x220] sm:$0xff]
      %v1462 = vld [vmem:[%s228 + $0x228] sm:$0xff]
      %v1463 = vld [vmem:[%s228 + $0x230] sm:$0xff]
      %v1464 = vld [vmem:[%s228 + $0x238] sm:$0xff]
      %v1465 = vld [vmem:[%s228 + $0x240] sm:$0xff]
      %v1466 = vld [vmem:[%s228 + $0x248] sm:$0xff]
      %v1467 = vld [vmem:[%s228 + $0x250] sm:$0xff]
      %v1468 = vld [vmem:[%s228 + $0x258] sm:$0xff]
      %v1469 = vld [vmem:[%s228 + $0x260] sm:$0xff]
      %v1470 = vld [vmem:[%s228 + $0x268] sm:$0xff]
      %v1471 = vld [vmem:[%s228 + $0x270] sm:$0xff]
      %v1472 = vld [vmem:[%s228 + $0x278] sm:$0xff]
      %v1473 = vld [vmem:[%s228 + $0x280] sm:$0xff]
      %v1474 = vld [vmem:[%s228 + $0x288] sm:$0xff]
      %v1475 = vld [vmem:[%s228 + $0x290] sm:$0xff]
      %v1476 = vld [vmem:[%s228 + $0x298] sm:$0xff]
      %v1477 = vld [vmem:[%s228 + $0x2a0] sm:$0xff]
      %v1478 = vld [vmem:[%s228 + $0x2a8] sm:$0xff]
      %v1479 = vld [vmem:[%s228 + $0x2b0] sm:$0xff]
      %v1480 = vld [vmem:[%s228 + $0x2b8] sm:$0xff]
      %v1481 = vld [vmem:[%s228 + $0x2c0] sm:$0xff]
      %v1482 = vld [vmem:[%s228 + $0x2c8] sm:$0xff]
      %v1483 = vld [vmem:[%s228 + $0x2d0] sm:$0xff]
      %v1484 = vld [vmem:[%s228 + $0x2d8] sm:$0xff]
      %v1485 = vld [vmem:[%s228 + $0x2e0] sm:$0xff]
      %v1486 = vld [vmem:[%s228 + $0x2e8] sm:$0xff]
      %v1487 = vld [vmem:[%s228 + $0x2f0] sm:$0xff]
      %v1488 = vld [vmem:[%s228 + $0x2f8] sm:$0xff]
      %v1489 = vld [vmem:[%s228 + $0x300] sm:$0xff]
      %v1490 = vld [vmem:[%s228 + $0x308] sm:$0xff]
      %v1491 = vld [vmem:[%s228 + $0x310] sm:$0xff]
      %v1492 = vld [vmem:[%s228 + $0x318] sm:$0xff]
      %v1493 = vld [vmem:[%s228 + $0x320] sm:$0xff]
      %v1494 = vld [vmem:[%s228 + $0x328] sm:$0xff]
      %v1495 = vld [vmem:[%s228 + $0x330] sm:$0xff]
      %v1496 = vld [vmem:[%s228 + $0x338] sm:$0xff]
      %v1497 = vld [vmem:[%s228 + $0x340] sm:$0xff]
      %v1498 = vld [vmem:[%s228 + $0x348] sm:$0xff]
      %v1499 = vld [vmem:[%s228 + $0x350] sm:$0xff]
      %v1500 = vld [vmem:[%s228 + $0x358] sm:$0xff]
      %v1501 = vld [vmem:[%s228 + $0x360] sm:$0xff]
      %v1502 = vld [vmem:[%s228 + $0x368] sm:$0xff]
      %v1503 = vld [vmem:[%s228 + $0x370] sm:$0xff]
      %v1504 = vld [vmem:[%s228 + $0x378] sm:$0xff]
      %v1505 = vld [vmem:[%s228 + $0x380] sm:$0xff]
      %v1506 = vld [vmem:[%s228 + $0x388] sm:$0xff]
      %v1507 = vld [vmem:[%s228 + $0x390] sm:$0xff]
      %v1508 = vld [vmem:[%s228 + $0x398] sm:$0xff]
      %v1509 = vld [vmem:[%s228 + $0x3a0] sm:$0xff]
      %v1510 = vld [vmem:[%s228 + $0x3a8] sm:$0xff]
      %v1511 = vld [vmem:[%s228 + $0x3b0] sm:$0xff]
      %v1512 = vld [vmem:[%s228 + $0x3b8] sm:$0xff]
      %v1513 = vld [vmem:[%s228 + $0x3c0] sm:$0xff]
      %v1514 = vld [vmem:[%s228 + $0x3c8] sm:$0xff]
      %v1515 = vld [vmem:[%s228 + $0x3d0] sm:$0xff]
      %v1516 = vld [vmem:[%s228 + $0x3d8] sm:$0xff]
      %v1517 = vld [vmem:[%s228 + $0x3e0] sm:$0xff]
      %v1518 = vld [vmem:[%s228 + $0x3e8] sm:$0xff]
      %v1519 = vld [vmem:[%s228 + $0x3f0] sm:$0xff]
      %v1520 = vld [vmem:[%s228 + $0x3f8] sm:$0xff]
      %v1649 = vunpack.c.l.b16 %v1393
      %v1650 = vunpack.c.h.b16 %v1393
      %v1651 = vunpack.c.l.b16 %v1394
      %v1652 = vunpack.c.h.b16 %v1394
      %v1653 = vunpack.c.l.b16 %v1395
      %v1654 = vunpack.c.h.b16 %v1395
      %v1655 = vunpack.c.l.b16 %v1396
      %v1656 = vunpack.c.h.b16 %v1396
      %v1657 = vunpack.c.l.b16 %v1397
      %v1658 = vunpack.c.h.b16 %v1397
      %v1659 = vunpack.c.l.b16 %v1398
      %v1660 = vunpack.c.h.b16 %v1398
      %v1661 = vunpack.c.l.b16 %v1399
      %v1662 = vunpack.c.h.b16 %v1399
      %v1663 = vunpack.c.l.b16 %v1400
      %v1664 = vunpack.c.h.b16 %v1400
      %v1665 = vunpack.c.l.b16 %v1401
      %v1666 = vunpack.c.h.b16 %v1401
      %v1667 = vunpack.c.l.b16 %v1402
      %v1668 = vunpack.c.h.b16 %v1402
      %v1669 = vunpack.c.l.b16 %v1403
      %v1670 = vunpack.c.h.b16 %v1403
      %v1671 = vunpack.c.l.b16 %v1404
      %v1672 = vunpack.c.h.b16 %v1404
      %v1673 = vunpack.c.l.b16 %v1405
      %v1674 = vunpack.c.h.b16 %v1405
      %v1675 = vunpack.c.l.b16 %v1406
      %v1676 = vunpack.c.h.b16 %v1406
      %v1677 = vunpack.c.l.b16 %v1407
      %v1678 = vunpack.c.h.b16 %v1407
      %v1679 = vunpack.c.l.b16 %v1408
      %v1680 = vunpack.c.h.b16 %v1408
      %v1681 = vunpack.c.l.b16 %v1409
      %v1682 = vunpack.c.h.b16 %v1409
      %v1683 = vunpack.c.l.b16 %v1410
      %v1684 = vunpack.c.h.b16 %v1410
      %v1685 = vunpack.c.l.b16 %v1411
      %v1686 = vunpack.c.h.b16 %v1411
      %v1687 = vunpack.c.l.b16 %v1412
      %v1688 = vunpack.c.h.b16 %v1412
      %v1689 = vunpack.c.l.b16 %v1413
      %v1690 = vunpack.c.h.b16 %v1413
      %v1691 = vunpack.c.l.b16 %v1414
      %v1692 = vunpack.c.h.b16 %v1414
      %v1693 = vunpack.c.l.b16 %v1415
      %v1694 = vunpack.c.h.b16 %v1415
      %v1695 = vunpack.c.l.b16 %v1416
      %v1696 = vunpack.c.h.b16 %v1416
      %v1697 = vunpack.c.l.b16 %v1417
      %v1698 = vunpack.c.h.b16 %v1417
      %v1699 = vunpack.c.l.b16 %v1418
      %v1700 = vunpack.c.h.b16 %v1418
      %v1701 = vunpack.c.l.b16 %v1419
      %v1702 = vunpack.c.h.b16 %v1419
      %v1703 = vunpack.c.l.b16 %v1420
      %v1704 = vunpack.c.h.b16 %v1420
      %v1705 = vunpack.c.l.b16 %v1421
      %v1706 = vunpack.c.h.b16 %v1421
      %v1707 = vunpack.c.l.b16 %v1422
      %v1708 = vunpack.c.h.b16 %v1422
      %v1709 = vunpack.c.l.b16 %v1423
      %v1710 = vunpack.c.h.b16 %v1423
      %v1711 = vunpack.c.l.b16 %v1424
      %v1712 = vunpack.c.h.b16 %v1424
      %v1713 = vunpack.c.l.b16 %v1425
      %v1714 = vunpack.c.h.b16 %v1425
      %v1715 = vunpack.c.l.b16 %v1426
      %v1716 = vunpack.c.h.b16 %v1426
      %v1717 = vunpack.c.l.b16 %v1427
      %v1718 = vunpack.c.h.b16 %v1427
      %v1719 = vunpack.c.l.b16 %v1428
      %v1720 = vunpack.c.h.b16 %v1428
      %v1721 = vunpack.c.l.b16 %v1429
      %v1722 = vunpack.c.h.b16 %v1429
      %v1723 = vunpack.c.l.b16 %v1430
      %v1724 = vunpack.c.h.b16 %v1430
      %v1725 = vunpack.c.l.b16 %v1431
      %v1726 = vunpack.c.h.b16 %v1431
      %v1727 = vunpack.c.l.b16 %v1432
      %v1728 = vunpack.c.h.b16 %v1432
      %v1729 = vunpack.c.l.b16 %v1433
      %v1730 = vunpack.c.h.b16 %v1433
      %v1731 = vunpack.c.l.b16 %v1434
      %v1732 = vunpack.c.h.b16 %v1434
      %v1733 = vunpack.c.l.b16 %v1435
      %v1734 = vunpack.c.h.b16 %v1435
      %v1735 = vunpack.c.l.b16 %v1436
      %v1736 = vunpack.c.h.b16 %v1436
      %v1737 = vunpack.c.l.b16 %v1437
      %v1738 = vunpack.c.h.b16 %v1437
      %v1739 = vunpack.c.l.b16 %v1438
      %v1740 = vunpack.c.h.b16 %v1438
      %v1741 = vunpack.c.l.b16 %v1439
      %v1742 = vunpack.c.h.b16 %v1439
      %v1743 = vunpack.c.l.b16 %v1440
      %v1744 = vunpack.c.h.b16 %v1440
      %v1745 = vunpack.c.l.b16 %v1441
      %v1746 = vunpack.c.h.b16 %v1441
      %v1747 = vunpack.c.l.b16 %v1442
      %v1748 = vunpack.c.h.b16 %v1442
      %v1749 = vunpack.c.l.b16 %v1443
      %v1750 = vunpack.c.h.b16 %v1443
      %v1751 = vunpack.c.l.b16 %v1444
      %v1752 = vunpack.c.h.b16 %v1444
      %v1753 = vunpack.c.l.b16 %v1445
      %v1754 = vunpack.c.h.b16 %v1445
      %v1755 = vunpack.c.l.b16 %v1446
      %v1756 = vunpack.c.h.b16 %v1446
      %v1757 = vunpack.c.l.b16 %v1447
      %v1758 = vunpack.c.h.b16 %v1447
      %v1759 = vunpack.c.l.b16 %v1448
      %v1760 = vunpack.c.h.b16 %v1448
      %v1761 = vunpack.c.l.b16 %v1449
      %v1762 = vunpack.c.h.b16 %v1449
      %v1763 = vunpack.c.l.b16 %v1450
      %v1764 = vunpack.c.h.b16 %v1450
      %v1765 = vunpack.c.l.b16 %v1451
      %v1766 = vunpack.c.h.b16 %v1451
      %v1767 = vunpack.c.l.b16 %v1452
      %v1768 = vunpack.c.h.b16 %v1452
      %v1769 = vunpack.c.l.b16 %v1453
      %v1770 = vunpack.c.h.b16 %v1453
      %v1771 = vunpack.c.l.b16 %v1454
      %v1772 = vunpack.c.h.b16 %v1454
      %v1773 = vunpack.c.l.b16 %v1455
      %v1774 = vunpack.c.h.b16 %v1455
      %v1775 = vunpack.c.l.b16 %v1456
      %v1776 = vunpack.c.h.b16 %v1456
      %v1777 = vunpack.c.l.b16 %v1457
      %v1778 = vunpack.c.h.b16 %v1457
      %v1779 = vunpack.c.l.b16 %v1458
      %v1780 = vunpack.c.h.b16 %v1458
      %v1781 = vunpack.c.l.b16 %v1459
      %v1782 = vunpack.c.h.b16 %v1459
      %v1783 = vunpack.c.l.b16 %v1460
      %v1784 = vunpack.c.h.b16 %v1460
      %v1785 = vunpack.c.l.b16 %v1461
      %v1786 = vunpack.c.h.b16 %v1461
      %v1787 = vunpack.c.l.b16 %v1462
      %v1788 = vunpack.c.h.b16 %v1462
      %v1789 = vunpack.c.l.b16 %v1463
      %v1790 = vunpack.c.h.b16 %v1463
      %v1791 = vunpack.c.l.b16 %v1464
      %v1792 = vunpack.c.h.b16 %v1464
      %v1793 = vunpack.c.l.b16 %v1465
      %v1794 = vunpack.c.h.b16 %v1465
      %v1795 = vunpack.c.l.b16 %v1466
      %v1796 = vunpack.c.h.b16 %v1466
      %v1797 = vunpack.c.l.b16 %v1467
      %v1798 = vunpack.c.h.b16 %v1467
      %v1799 = vunpack.c.l.b16 %v1468
      %v1800 = vunpack.c.h.b16 %v1468
      %v1801 = vunpack.c.l.b16 %v1469
      %v1802 = vunpack.c.h.b16 %v1469
      %v1803 = vunpack.c.l.b16 %v1470
      %v1804 = vunpack.c.h.b16 %v1470
      %v1805 = vunpack.c.l.b16 %v1471
      %v1806 = vunpack.c.h.b16 %v1471
      %v1807 = vunpack.c.l.b16 %v1472
      %v1808 = vunpack.c.h.b16 %v1472
      %v1809 = vunpack.c.l.b16 %v1473
      %v1810 = vunpack.c.h.b16 %v1473
      %v1811 = vunpack.c.l.b16 %v1474
      %v1812 = vunpack.c.h.b16 %v1474
      %v1813 = vunpack.c.l.b16 %v1475
      %v1814 = vunpack.c.h.b16 %v1475
      %v1815 = vunpack.c.l.b16 %v1476
      %v1816 = vunpack.c.h.b16 %v1476
      %v1817 = vunpack.c.l.b16 %v1477
      %v1818 = vunpack.c.h.b16 %v1477
      %v1819 = vunpack.c.l.b16 %v1478
      %v1820 = vunpack.c.h.b16 %v1478
      %v1821 = vunpack.c.l.b16 %v1479
      %v1822 = vunpack.c.h.b16 %v1479
      %v1823 = vunpack.c.l.b16 %v1480
      %v1824 = vunpack.c.h.b16 %v1480
      %v1825 = vunpack.c.l.b16 %v1481
      %v1826 = vunpack.c.h.b16 %v1481
      %v1827 = vunpack.c.l.b16 %v1482
      %v1828 = vunpack.c.h.b16 %v1482
      %v1829 = vunpack.c.l.b16 %v1483
      %v1830 = vunpack.c.h.b16 %v1483
      %v1831 = vunpack.c.l.b16 %v1484
      %v1832 = vunpack.c.h.b16 %v1484
      %v1833 = vunpack.c.l.b16 %v1485
      %v1834 = vunpack.c.h.b16 %v1485
      %v1835 = vunpack.c.l.b16 %v1486
      %v1836 = vunpack.c.h.b16 %v1486
      %v1837 = vunpack.c.l.b16 %v1487
      %v1838 = vunpack.c.h.b16 %v1487
      %v1839 = vunpack.c.l.b16 %v1488
      %v1840 = vunpack.c.h.b16 %v1488
      %v1841 = vunpack.c.l.b16 %v1489
      %v1842 = vunpack.c.h.b16 %v1489
      %v1843 = vunpack.c.l.b16 %v1490
      %v1844 = vunpack.c.h.b16 %v1490
      %v1845 = vunpack.c.l.b16 %v1491
      %v1846 = vunpack.c.h.b16 %v1491
      %v1847 = vunpack.c.l.b16 %v1492
      %v1848 = vunpack.c.h.b16 %v1492
      %v1849 = vunpack.c.l.b16 %v1493
      %v1850 = vunpack.c.h.b16 %v1493
      %v1851 = vunpack.c.l.b16 %v1494
      %v1852 = vunpack.c.h.b16 %v1494
      %v1853 = vunpack.c.l.b16 %v1495
      %v1854 = vunpack.c.h.b16 %v1495
      %v1855 = vunpack.c.l.b16 %v1496
      %v1856 = vunpack.c.h.b16 %v1496
      %v1857 = vunpack.c.l.b16 %v1497
      %v1858 = vunpack.c.h.b16 %v1497
      %v1859 = vunpack.c.l.b16 %v1498
      %v1860 = vunpack.c.h.b16 %v1498
      %v1861 = vunpack.c.l.b16 %v1499
      %v1862 = vunpack.c.h.b16 %v1499
      %v1863 = vunpack.c.l.b16 %v1500
      %v1864 = vunpack.c.h.b16 %v1500
      %v1865 = vunpack.c.l.b16 %v1501
      %v1866 = vunpack.c.h.b16 %v1501
      %v1867 = vunpack.c.l.b16 %v1502
      %v1868 = vunpack.c.h.b16 %v1502
      %v1869 = vunpack.c.l.b16 %v1503
      %v1870 = vunpack.c.h.b16 %v1503
      %v1871 = vunpack.c.l.b16 %v1504
      %v1872 = vunpack.c.h.b16 %v1504
      %v1873 = vunpack.c.l.b16 %v1505
      %v1874 = vunpack.c.h.b16 %v1505
      %v1875 = vunpack.c.l.b16 %v1506
      %v1876 = vunpack.c.h.b16 %v1506
      %v1877 = vunpack.c.l.b16 %v1507
      %v1878 = vunpack.c.h.b16 %v1507
      %v1879 = vunpack.c.l.b16 %v1508
      %v1880 = vunpack.c.h.b16 %v1508
      %v1881 = vunpack.c.l.b16 %v1509
      %v1882 = vunpack.c.h.b16 %v1509
      %v1883 = vunpack.c.l.b16 %v1510
      %v1884 = vunpack.c.h.b16 %v1510
      %v1885 = vunpack.c.l.b16 %v1511
      %v1886 = vunpack.c.h.b16 %v1511
      %v1887 = vunpack.c.l.b16 %v1512
      %v1888 = vunpack.c.h.b16 %v1512
      %v1889 = vunpack.c.l.b16 %v1513
      %v1890 = vunpack.c.h.b16 %v1513
      %v1891 = vunpack.c.l.b16 %v1514
      %v1892 = vunpack.c.h.b16 %v1514
      %v1893 = vunpack.c.l.b16 %v1515
      %v1894 = vunpack.c.h.b16 %v1515
      %v1895 = vunpack.c.l.b16 %v1516
      %v1896 = vunpack.c.h.b16 %v1516
      %v1897 = vunpack.c.l.b16 %v1517
      %v1898 = vunpack.c.h.b16 %v1517
      %v1899 = vunpack.c.l.b16 %v1518
      %v1900 = vunpack.c.h.b16 %v1518
      %v1901 = vunpack.c.l.b16 %v1519
      %v1902 = vunpack.c.h.b16 %v1519
      %v1903 = vunpack.c.l.b16 %v1520
      %v1904 = vunpack.c.h.b16 %v1520
      %v1905 = vpack.c.b16 %v1657, %v1649
      %v1906 = vpack.c.b16 %v1658, %v1650
      %v1907 = vpack.c.b16 %v1659, %v1651
      %v1908 = vpack.c.b16 %v1660, %v1652
      %v1909 = vpack.c.b16 %v1661, %v1653
      %v1910 = vpack.c.b16 %v1662, %v1654
      %v1911 = vpack.c.b16 %v1663, %v1655
      %v1912 = vpack.c.b16 %v1664, %v1656
      %v1913 = vpack.c.b16 %v1673, %v1665
      %v1914 = vpack.c.b16 %v1674, %v1666
      %v1915 = vpack.c.b16 %v1675, %v1667
      %v1916 = vpack.c.b16 %v1676, %v1668
      %v1917 = vpack.c.b16 %v1677, %v1669
      %v1918 = vpack.c.b16 %v1678, %v1670
      %v1919 = vpack.c.b16 %v1679, %v1671
      %v1920 = vpack.c.b16 %v1680, %v1672
      %v1921 = vpack.c.b16 %v1689, %v1681
      %v1922 = vpack.c.b16 %v1690, %v1682
      %v1923 = vpack.c.b16 %v1691, %v1683
      %v1924 = vpack.c.b16 %v1692, %v1684
      %v1925 = vpack.c.b16 %v1693, %v1685
      %v1926 = vpack.c.b16 %v1694, %v1686
      %v1927 = vpack.c.b16 %v1695, %v1687
      %v1928 = vpack.c.b16 %v1696, %v1688
      %v1929 = vpack.c.b16 %v1705, %v1697
      %v1930 = vpack.c.b16 %v1706, %v1698
      %v1931 = vpack.c.b16 %v1707, %v1699
      %v1932 = vpack.c.b16 %v1708, %v1700
      %v1933 = vpack.c.b16 %v1709, %v1701
      %v1934 = vpack.c.b16 %v1710, %v1702
      %v1935 = vpack.c.b16 %v1711, %v1703
      %v1936 = vpack.c.b16 %v1712, %v1704
      %v1937 = vpack.c.b16 %v1721, %v1713
      %v1938 = vpack.c.b16 %v1722, %v1714
      %v1939 = vpack.c.b16 %v1723, %v1715
      %v1940 = vpack.c.b16 %v1724, %v1716
      %v1941 = vpack.c.b16 %v1725, %v1717
      %v1942 = vpack.c.b16 %v1726, %v1718
      %v1943 = vpack.c.b16 %v1727, %v1719
      %v1944 = vpack.c.b16 %v1728, %v1720
      %v1945 = vpack.c.b16 %v1737, %v1729
      %v1946 = vpack.c.b16 %v1738, %v1730
      %v1947 = vpack.c.b16 %v1739, %v1731
      %v1948 = vpack.c.b16 %v1740, %v1732
      %v1949 = vpack.c.b16 %v1741, %v1733
      %v1950 = vpack.c.b16 %v1742, %v1734
      %v1951 = vpack.c.b16 %v1743, %v1735
      %v1952 = vpack.c.b16 %v1744, %v1736
      %v1953 = vpack.c.b16 %v1753, %v1745
      %v1954 = vpack.c.b16 %v1754, %v1746
      %v1955 = vpack.c.b16 %v1755, %v1747
      %v1956 = vpack.c.b16 %v1756, %v1748
      %v1957 = vpack.c.b16 %v1757, %v1749
      %v1958 = vpack.c.b16 %v1758, %v1750
      %v1959 = vpack.c.b16 %v1759, %v1751
      %v1960 = vpack.c.b16 %v1760, %v1752
      %v1961 = vpack.c.b16 %v1769, %v1761
      %v1962 = vpack.c.b16 %v1770, %v1762
      %v1963 = vpack.c.b16 %v1771, %v1763
      %v1964 = vpack.c.b16 %v1772, %v1764
      %v1965 = vpack.c.b16 %v1773, %v1765
      %v1966 = vpack.c.b16 %v1774, %v1766
      %v1967 = vpack.c.b16 %v1775, %v1767
      %v1968 = vpack.c.b16 %v1776, %v1768
      %v1969 = vpack.c.b16 %v1785, %v1777
      %v1970 = vpack.c.b16 %v1786, %v1778
      %v1971 = vpack.c.b16 %v1787, %v1779
      %v1972 = vpack.c.b16 %v1788, %v1780
      %v1973 = vpack.c.b16 %v1789, %v1781
      %v1974 = vpack.c.b16 %v1790, %v1782
      %v1975 = vpack.c.b16 %v1791, %v1783
      %v1976 = vpack.c.b16 %v1792, %v1784
      %v1977 = vpack.c.b16 %v1801, %v1793
      %v1978 = vpack.c.b16 %v1802, %v1794
      %v1979 = vpack.c.b16 %v1803, %v1795
      %v1980 = vpack.c.b16 %v1804, %v1796
      %v1981 = vpack.c.b16 %v1805, %v1797
      %v1982 = vpack.c.b16 %v1806, %v1798
      %v1983 = vpack.c.b16 %v1807, %v1799
      %v1984 = vpack.c.b16 %v1808, %v1800
      %v1985 = vpack.c.b16 %v1817, %v1809
      %v1986 = vpack.c.b16 %v1818, %v1810
      %v1987 = vpack.c.b16 %v1819, %v1811
      %v1988 = vpack.c.b16 %v1820, %v1812
      %v1989 = vpack.c.b16 %v1821, %v1813
      %v1990 = vpack.c.b16 %v1822, %v1814
      %v1991 = vpack.c.b16 %v1823, %v1815
      %v1992 = vpack.c.b16 %v1824, %v1816
      %v1993 = vpack.c.b16 %v1833, %v1825
      %v1994 = vpack.c.b16 %v1834, %v1826
      %v1995 = vpack.c.b16 %v1835, %v1827
      %v1996 = vpack.c.b16 %v1836, %v1828
      %v1997 = vpack.c.b16 %v1837, %v1829
      %v1998 = vpack.c.b16 %v1838, %v1830
      %v1999 = vpack.c.b16 %v1839, %v1831
      %v2000 = vpack.c.b16 %v1840, %v1832
      %v2001 = vpack.c.b16 %v1849, %v1841
      %v2002 = vpack.c.b16 %v1850, %v1842
      %v2003 = vpack.c.b16 %v1851, %v1843
      %v2004 = vpack.c.b16 %v1852, %v1844
      %v2005 = vpack.c.b16 %v1853, %v1845
      %v2006 = vpack.c.b16 %v1854, %v1846
      %v2007 = vpack.c.b16 %v1855, %v1847
      %v2008 = vpack.c.b16 %v1856, %v1848
      %v2009 = vpack.c.b16 %v1865, %v1857
      %v2010 = vpack.c.b16 %v1866, %v1858
      %v2011 = vpack.c.b16 %v1867, %v1859
      %v2012 = vpack.c.b16 %v1868, %v1860
      %v2013 = vpack.c.b16 %v1869, %v1861
      %v2014 = vpack.c.b16 %v1870, %v1862
      %v2015 = vpack.c.b16 %v1871, %v1863
      %v2016 = vpack.c.b16 %v1872, %v1864
      %v2017 = vpack.c.b16 %v1881, %v1873
      %v2018 = vpack.c.b16 %v1882, %v1874
      %v2019 = vpack.c.b16 %v1883, %v1875
      %v2020 = vpack.c.b16 %v1884, %v1876
      %v2021 = vpack.c.b16 %v1885, %v1877
      %v2022 = vpack.c.b16 %v1886, %v1878
      %v2023 = vpack.c.b16 %v1887, %v1879
      %v2024 = vpack.c.b16 %v1888, %v1880
      %v2025 = vpack.c.b16 %v1897, %v1889
      %v2026 = vpack.c.b16 %v1898, %v1890
      %v2027 = vpack.c.b16 %v1899, %v1891
      %v2028 = vpack.c.b16 %v1900, %v1892
      %v2029 = vpack.c.b16 %v1901, %v1893
      %v2030 = vpack.c.b16 %v1902, %v1894
      %v2031 = vpack.c.b16 %v1903, %v1895
      %v2032 = vpack.c.b16 %v1904, %v1896
      %2161 = vmatprep.subr.bf16.mxu0 %v1266
      %2162 = vmatpush1.bf16.msra.mxu0 %v1265
      %2163 = vmatprep.subr.bf16.mxu0 %v1268
      %2164 = vmatpush1.bf16.msra.mxu0 %v1267
      %2165 = vmatprep.subr.bf16.mxu0 %v1270
      %2166 = vmatpush1.bf16.msra.mxu0 %v1269
      %2167 = vmatprep.subr.bf16.mxu0 %v1272
      %2168 = vmatpush1.bf16.msra.mxu0 %v1271
      %2169 = vmatprep.subr.bf16.mxu0 %v1274
      %2170 = vmatpush1.bf16.msra.mxu0 %v1273
      %2171 = vmatprep.subr.bf16.mxu0 %v1276
      %2172 = vmatpush1.bf16.msra.mxu0 %v1275
      %2173 = vmatprep.subr.bf16.mxu0 %v1278
      %2174 = vmatpush1.bf16.msra.mxu0 %v1277
      %2175 = vmatprep.subr.bf16.mxu0 %v1280
      %2176 = vmatpush1.bf16.msra.mxu0 %v1279
      %2177 = vmatprep.subr.bf16.mxu0 %v1282
      %2178 = vmatpush1.bf16.msra.mxu0 %v1281
      %2179 = vmatprep.subr.bf16.mxu0 %v1284
      %2180 = vmatpush1.bf16.msra.mxu0 %v1283
      %2181 = vmatprep.subr.bf16.mxu0 %v1286
      %2182 = vmatpush1.bf16.msra.mxu0 %v1285
      %2183 = vmatprep.subr.bf16.mxu0 %v1288
      %2184 = vmatpush1.bf16.msra.mxu0 %v1287
      %2185 = vmatprep.subr.bf16.mxu0 %v1290
      %2186 = vmatpush1.bf16.msra.mxu0 %v1289
      %2187 = vmatprep.subr.bf16.mxu0 %v1292
      %2188 = vmatpush1.bf16.msra.mxu0 %v1291
      %2189 = vmatprep.subr.bf16.mxu0 %v1294
      %2190 = vmatpush1.bf16.msra.mxu0 %v1293
      %2191 = vmatprep.subr.bf16.mxu0 %v1296
      %2192 = vmatpush1.bf16.msra.mxu0 %v1295
      %2193 = vmatprep.mubr.bf16.mxu0 %v1906
      %2194 = vmatmul.mubr.bf16.gmra.mrb[0].mxu0 %v1905
      %v2195 = vpop.f32.mrb[0].mxu0
      %v2196 = vadd.f32 0.0, %v2195
      %v2197 = vpop.f32.mrb[0].mxu0
      %v2198 = vadd.f32 0.0, %v2197
      %v2199 = vpop.f32.mrb[0].mxu0
      %v2200 = vadd.f32 0.0, %v2199
      %v2201 = vpop.f32.mrb[0].mxu0
      %v2202 = vadd.f32 0.0, %v2201
      %2203 = vmatprep.mubr.bf16.mxu0 %v1914
      %2204 = vmatmul.mubr.bf16.gmra.mrb[0].mxu0 %v1913
      %v2205 = vpop.f32.mrb[0].mxu0
      %v2206 = vadd.f32 0.0, %v2205
      %v2207 = vpop.f32.mrb[0].mxu0
      %v2208 = vadd.f32 0.0, %v2207
      %v2209 = vpop.f32.mrb[0].mxu0
      %v2210 = vadd.f32 0.0, %v2209
      %v2211 = vpop.f32.mrb[0].mxu0
      %v2212 = vadd.f32 0.0, %v2211
      %2213 = vmatprep.mubr.bf16.mxu0 %v1922
      %2214 = vmatmul.mubr.bf16.gmra.mrb[0].mxu0 %v1921
      %v2215 = vpop.f32.mrb[0].mxu0
      %v2216 = vadd.f32 0.0, %v2215
      %v2217 = vpop.f32.mrb[0].mxu0
      %v2218 = vadd.f32 0.0, %v2217
      %v2219 = vpop.f32.mrb[0].mxu0
      %v2220 = vadd.f32 0.0, %v2219
      %v2221 = vpop.f32.mrb[0].mxu0
      %v2222 = vadd.f32 0.0, %v2221
      %2223 = vmatprep.mubr.bf16.mxu0 %v1930
      %2224 = vmatmul.mubr.bf16.gmra.mrb[0].mxu0 %v1929
      %v2225 = vpop.f32.mrb[0].mxu0
      %v2226 = vadd.f32 0.0, %v2225
      %v2227 = vpop.f32.mrb[0].mxu0
      %v2228 = vadd.f32 0.0, %v2227
      %v2229 = vpop.f32.mrb[0].mxu0
      %v2230 = vadd.f32 0.0, %v2229
      %v2231 = vpop.f32.mrb[0].mxu0
      %v2232 = vadd.f32 0.0, %v2231
      %2233 = vmatprep.mubr.bf16.mxu0 %v1938
      %2234 = vmatmul.mubr.bf16.gmra.mrb[0].mxu0 %v1937
      %v2235 = vpop.f32.mrb[0].mxu0
      %v2236 = vadd.f32 0.0, %v2235
      %v2237 = vpop.f32.mrb[0].mxu0
      %v2238 = vadd.f32 0.0, %v2237
      %v2239 = vpop.f32.mrb[0].mxu0
      %v2240 = vadd.f32 0.0, %v2239
      %v2241 = vpop.f32.mrb[0].mxu0
      %v2242 = vadd.f32 0.0, %v2241
      %2243 = vmatprep.mubr.bf16.mxu0 %v1946
      %2244 = vmatmul.mubr.bf16.gmra.mrb[0].mxu0 %v1945
      %v2245 = vpop.f32.mrb[0].mxu0
      %v2246 = vadd.f32 0.0, %v2245
      %v2247 = vpop.f32.mrb[0].mxu0
      %v2248 = vadd.f32 0.0, %v2247
      %v2249 = vpop.f32.mrb[0].mxu0
      %v2250 = vadd.f32 0.0, %v2249
      %v2251 = vpop.f32.mrb[0].mxu0
      %v2252 = vadd.f32 0.0, %v2251
      %2253 = vmatprep.mubr.bf16.mxu0 %v1954
      %2254 = vmatmul.mubr.bf16.gmra.mrb[0].mxu0 %v1953
      %v2255 = vpop.f32.mrb[0].mxu0
      %v2256 = vadd.f32 0.0, %v2255
      %v2257 = vpop.f32.mrb[0].mxu0
      %v2258 = vadd.f32 0.0, %v2257
      %v2259 = vpop.f32.mrb[0].mxu0
      %v2260 = vadd.f32 0.0, %v2259
      %v2261 = vpop.f32.mrb[0].mxu0
      %v2262 = vadd.f32 0.0, %v2261
      %2263 = vmatprep.mubr.bf16.mxu0 %v1962
      %2264 = vmatmul.mubr.bf16.gmra.mrb[0].mxu0 %v1961
      %v2265 = vpop.f32.mrb[0].mxu0
      %v2266 = vadd.f32 0.0, %v2265
      %v2267 = vpop.f32.mrb[0].mxu0
      %v2268 = vadd.f32 0.0, %v2267
      %v2269 = vpop.f32.mrb[0].mxu0
      %v2270 = vadd.f32 0.0, %v2269
      %v2271 = vpop.f32.mrb[0].mxu0
      %v2272 = vadd.f32 0.0, %v2271
      %2273 = vmatprep.mubr.bf16.mxu0 %v1970
      %2274 = vmatmul.mubr.bf16.gmra.mrb[0].mxu0 %v1969
      %v2275 = vpop.f32.mrb[0].mxu0
      %v2276 = vadd.f32 0.0, %v2275
      %v2277 = vpop.f32.mrb[0].mxu0
      %v2278 = vadd.f32 0.0, %v2277
      %v2279 = vpop.f32.mrb[0].mxu0
      %v2280 = vadd.f32 0.0, %v2279
      %v2281 = vpop.f32.mrb[0].mxu0
      %v2282 = vadd.f32 0.0, %v2281
      %2283 = vmatprep.mubr.bf16.mxu0 %v1978
      %2284 = vmatmul.mubr.bf16.gmra.mrb[0].mxu0 %v1977
      %v2285 = vpop.f32.mrb[0].mxu0
      %v2286 = vadd.f32 0.0, %v2285
      %v2287 = vpop.f32.mrb[0].mxu0
      %v2288 = vadd.f32 0.0, %v2287
      %v2289 = vpop.f32.mrb[0].mxu0
      %v2290 = vadd.f32 0.0, %v2289
      %v2291 = vpop.f32.mrb[0].mxu0
      %v2292 = vadd.f32 0.0, %v2291
      %2293 = vmatprep.mubr.bf16.mxu0 %v1986
      %2294 = vmatmul.mubr.bf16.gmra.mrb[0].mxu0 %v1985
      %v2295 = vpop.f32.mrb[0].mxu0
      %v2296 = vadd.f32 0.0, %v2295
      %v2297 = vpop.f32.mrb[0].mxu0
      %v2298 = vadd.f32 0.0, %v2297
      %v2299 = vpop.f32.mrb[0].mxu0
      %v2300 = vadd.f32 0.0, %v2299
      %v2301 = vpop.f32.mrb[0].mxu0
      %v2302 = vadd.f32 0.0, %v2301
      %2303 = vmatprep.mubr.bf16.mxu0 %v1994
      %2304 = vmatmul.mubr.bf16.gmra.mrb[0].mxu0 %v1993
      %v2305 = vpop.f32.mrb[0].mxu0
      %v2306 = vadd.f32 0.0, %v2305
      %v2307 = vpop.f32.mrb[0].mxu0
      %v2308 = vadd.f32 0.0, %v2307
      %v2309 = vpop.f32.mrb[0].mxu0
      %v2310 = vadd.f32 0.0, %v2309
      %v2311 = vpop.f32.mrb[0].mxu0
      %v2312 = vadd.f32 0.0, %v2311
      %2313 = vmatprep.mubr.bf16.mxu0 %v2002
      %2314 = vmatmul.mubr.bf16.gmra.mrb[0].mxu0 %v2001
      %v2315 = vpop.f32.mrb[0].mxu0
      %v2316 = vadd.f32 0.0, %v2315
      %v2317 = vpop.f32.mrb[0].mxu0
      %v2318 = vadd.f32 0.0, %v2317
      %v2319 = vpop.f32.mrb[0].mxu0
      %v2320 = vadd.f32 0.0, %v2319
      %v2321 = vpop.f32.mrb[0].mxu0
      %v2322 = vadd.f32 0.0, %v2321
      %2323 = vmatprep.mubr.bf16.mxu0 %v2010
      %2324 = vmatmul.mubr.bf16.gmra.mrb[0].mxu0 %v2009
      %v2325 = vpop.f32.mrb[0].mxu0
      %v2326 = vadd.f32 0.0, %v2325
      %v2327 = vpop.f32.mrb[0].mxu0
      %v2328 = vadd.f32 0.0, %v2327
      %v2329 = vpop.f32.mrb[0].mxu0
      %v2330 = vadd.f32 0.0, %v2329
      %v2331 = vpop.f32.mrb[0].mxu0
      %v2332 = vadd.f32 0.0, %v2331
      %2333 = vmatprep.mubr.bf16.mxu0 %v2018
      %2334 = vmatmul.mubr.bf16.gmra.mrb[0].mxu0 %v2017
      %v2335 = vpop.f32.mrb[0].mxu0
      %v2336 = vadd.f32 0.0, %v2335
      %v2337 = vpop.f32.mrb[0].mxu0
      %v2338 = vadd.f32 0.0, %v2337
      %v2339 = vpop.f32.mrb[0].mxu0
      %v2340 = vadd.f32 0.0, %v2339
      %v2341 = vpop.f32.mrb[0].mxu0
      %v2342 = vadd.f32 0.0, %v2341
      %2343 = vmatprep.mubr.bf16.mxu0 %v2026
      %2344 = vmatmul.mubr.bf16.gmra.mrb[0].mxu0 %v2025
      %v2345 = vpop.f32.mrb[0].mxu0
      %v2346 = vadd.f32 0.0, %v2345
      %v2347 = vpop.f32.mrb[0].mxu0
      %v2348 = vadd.f32 0.0, %v2347
      %v2349 = vpop.f32.mrb[0].mxu0
      %v2350 = vadd.f32 0.0, %v2349
      %v2351 = vpop.f32.mrb[0].mxu0
      %v2352 = vadd.f32 0.0, %v2351
      %2353 = vdwg.mxu0
      %2354 = vmatprep.subr.bf16.mxu0 %v1298
      %2355 = vmatpush1.bf16.msra.mxu0 %v1297
      %2356 = vmatprep.subr.bf16.mxu0 %v1300
      %2357 = vmatpush1.bf16.msra.mxu0 %v1299
      %2358 = vmatprep.subr.bf16.mxu0 %v1302
      %2359 = vmatpush1.bf16.msra.mxu0 %v1301
      %2360 = vmatprep.subr.bf16.mxu0 %v1304
      %2361 = vmatpush1.bf16.msra.mxu0 %v1303
      %2362 = vmatprep.subr.bf16.mxu0 %v1306
      %2363 = vmatpush1.bf16.msra.mxu0 %v1305
      %2364 = vmatprep.subr.bf16.mxu0 %v1308
      %2365 = vmatpush1.bf16.msra.mxu0 %v1307
      %2366 = vmatprep.subr.bf16.mxu0 %v1310
      %2367 = vmatpush1.bf16.msra.mxu0 %v1309
      %2368 = vmatprep.subr.bf16.mxu0 %v1312
      %2369 = vmatpush1.bf16.msra.mxu0 %v1311
      %2370 = vmatprep.subr.bf16.mxu0 %v1314
      %2371 = vmatpush1.bf16.msra.mxu0 %v1313
      %2372 = vmatprep.subr.bf16.mxu0 %v1316
      %2373 = vmatpush1.bf16.msra.mxu0 %v1315
      %2374 = vmatprep.subr.bf16.mxu0 %v1318
      %2375 = vmatpush1.bf16.msra.mxu0 %v1317
      %2376 = vmatprep.subr.bf16.mxu0 %v1320
      %2377 = vmatpush1.bf16.msra.mxu0 %v1319
      %2378 = vmatprep.subr.bf16.mxu0 %v1322
      %2379 = vmatpush1.bf16.msra.mxu0 %v1321
      %2380 = vmatprep.subr.bf16.mxu0 %v1324
      %2381 = vmatpush1.bf16.msra.mxu0 %v1323
      %2382 = vmatprep.subr.bf16.mxu0 %v1326
      %2383 = vmatpush1.bf16.msra.mxu0 %v1325
      %2384 = vmatprep.subr.bf16.mxu0 %v1328
      %2385 = vmatpush1.bf16.msra.mxu0 %v1327
      %2386 = vmatprep.mubr.bf16.mxu0 %v1908
      %2387 = vmatmul.mubr.bf16.gmra.mrb[0].mxu0 %v1907
      %v2388 = vpop.f32.mrb[0].mxu0
      %v2389 = vadd.f32 %v2196, %v2388
      %v2390 = vpop.f32.mrb[0].mxu0
      %v2391 = vadd.f32 %v2198, %v2390
      %v2392 = vpop.f32.mrb[0].mxu0
      %v2393 = vadd.f32 %v2200, %v2392
      %v2394 = vpop.f32.mrb[0].mxu0
      %v2395 = vadd.f32 %v2202, %v2394
      %2396 = vmatprep.mubr.bf16.mxu0 %v1916
      %2397 = vmatmul.mubr.bf16.gmra.mrb[0].mxu0 %v1915
      %v2398 = vpop.f32.mrb[0].mxu0
      %v2399 = vadd.f32 %v2206, %v2398
      %v2400 = vpop.f32.mrb[0].mxu0
      %v2401 = vadd.f32 %v2208, %v2400
      %v2402 = vpop.f32.mrb[0].mxu0
      %v2403 = vadd.f32 %v2210, %v2402
      %v2404 = vpop.f32.mrb[0].mxu0
      %v2405 = vadd.f32 %v2212, %v2404
      %2406 = vmatprep.mubr.bf16.mxu0 %v1924
      %2407 = vmatmul.mubr.bf16.gmra.mrb[0].mxu0 %v1923
      %v2408 = vpop.f32.mrb[0].mxu0
      %v2409 = vadd.f32 %v2216, %v2408
      %v2410 = vpop.f32.mrb[0].mxu0
      %v2411 = vadd.f32 %v2218, %v2410
      %v2412 = vpop.f32.mrb[0].mxu0
      %v2413 = vadd.f32 %v2220, %v2412
      %v2414 = vpop.f32.mrb[0].mxu0
      %v2415 = vadd.f32 %v2222, %v2414
      %2416 = vmatprep.mubr.bf16.mxu0 %v1932
      %2417 = vmatmul.mubr.bf16.gmra.mrb[0].mxu0 %v1931
      %v2418 = vpop.f32.mrb[0].mxu0
      %v2419 = vadd.f32 %v2226, %v2418
      %v2420 = vpop.f32.mrb[0].mxu0
      %v2421 = vadd.f32 %v2228, %v2420
      %v2422 = vpop.f32.mrb[0].mxu0
      %v2423 = vadd.f32 %v2230, %v2422
      %v2424 = vpop.f32.mrb[0].mxu0
      %v2425 = vadd.f32 %v2232, %v2424
      %2426 = vmatprep.mubr.bf16.mxu0 %v1940
      %2427 = vmatmul.mubr.bf16.gmra.mrb[0].mxu0 %v1939
      %v2428 = vpop.f32.mrb[0].mxu0
      %v2429 = vadd.f32 %v2236, %v2428
      %v2430 = vpop.f32.mrb[0].mxu0
      %v2431 = vadd.f32 %v2238, %v2430
      %v2432 = vpop.f32.mrb[0].mxu0
      %v2433 = vadd.f32 %v2240, %v2432
      %v2434 = vpop.f32.mrb[0].mxu0
      %v2435 = vadd.f32 %v2242, %v2434
      %2436 = vmatprep.mubr.bf16.mxu0 %v1948
      %2437 = vmatmul.mubr.bf16.gmra.mrb[0].mxu0 %v1947
      %v2438 = vpop.f32.mrb[0].mxu0
      %v2439 = vadd.f32 %v2246, %v2438
      %v2440 = vpop.f32.mrb[0].mxu0
      %v2441 = vadd.f32 %v2248, %v2440
      %v2442 = vpop.f32.mrb[0].mxu0
      %v2443 = vadd.f32 %v2250, %v2442
      %v2444 = vpop.f32.mrb[0].mxu0
      %v2445 = vadd.f32 %v2252, %v2444
      %2446 = vmatprep.mubr.bf16.mxu0 %v1956
      %2447 = vmatmul.mubr.bf16.gmra.mrb[0].mxu0 %v1955
      %v2448 = vpop.f32.mrb[0].mxu0
      %v2449 = vadd.f32 %v2256, %v2448
      %v2450 = vpop.f32.mrb[0].mxu0
      %v2451 = vadd.f32 %v2258, %v2450
      %v2452 = vpop.f32.mrb[0].mxu0
      %v2453 = vadd.f32 %v2260, %v2452
      %v2454 = vpop.f32.mrb[0].mxu0
      %v2455 = vadd.f32 %v2262, %v2454
      %2456 = vmatprep.mubr.bf16.mxu0 %v1964
      %2457 = vmatmul.mubr.bf16.gmra.mrb[0].mxu0 %v1963
      %v2458 = vpop.f32.mrb[0].mxu0
      %v2459 = vadd.f32 %v2266, %v2458
      %v2460 = vpop.f32.mrb[0].mxu0
      %v2461 = vadd.f32 %v2268, %v2460
      %v2462 = vpop.f32.mrb[0].mxu0
      %v2463 = vadd.f32 %v2270, %v2462
      %v2464 = vpop.f32.mrb[0].mxu0
      %v2465 = vadd.f32 %v2272, %v2464
      %2466 = vmatprep.mubr.bf16.mxu0 %v1972
      %2467 = vmatmul.mubr.bf16.gmra.mrb[0].mxu0 %v1971
      %v2468 = vpop.f32.mrb[0].mxu0
      %v2469 = vadd.f32 %v2276, %v2468
      %v2470 = vpop.f32.mrb[0].mxu0
      %v2471 = vadd.f32 %v2278, %v2470
      %v2472 = vpop.f32.mrb[0].mxu0
      %v2473 = vadd.f32 %v2280, %v2472
      %v2474 = vpop.f32.mrb[0].mxu0
      %v2475 = vadd.f32 %v2282, %v2474
      %2476 = vmatprep.mubr.bf16.mxu0 %v1980
      %2477 = vmatmul.mubr.bf16.gmra.mrb[0].mxu0 %v1979
      %v2478 = vpop.f32.mrb[0].mxu0
      %v2479 = vadd.f32 %v2286, %v2478
      %v2480 = vpop.f32.mrb[0].mxu0
      %v2481 = vadd.f32 %v2288, %v2480
      %v2482 = vpop.f32.mrb[0].mxu0
      %v2483 = vadd.f32 %v2290, %v2482
      %v2484 = vpop.f32.mrb[0].mxu0
      %v2485 = vadd.f32 %v2292, %v2484
      %2486 = vmatprep.mubr.bf16.mxu0 %v1988
      %2487 = vmatmul.mubr.bf16.gmra.mrb[0].mxu0 %v1987
      %v2488 = vpop.f32.mrb[0].mxu0
      %v2489 = vadd.f32 %v2296, %v2488
      %v2490 = vpop.f32.mrb[0].mxu0
      %v2491 = vadd.f32 %v2298, %v2490
      %v2492 = vpop.f32.mrb[0].mxu0
      %v2493 = vadd.f32 %v2300, %v2492
      %v2494 = vpop.f32.mrb[0].mxu0
      %v2495 = vadd.f32 %v2302, %v2494
      %2496 = vmatprep.mubr.bf16.mxu0 %v1996
      %2497 = vmatmul.mubr.bf16.gmra.mrb[0].mxu0 %v1995
      %v2498 = vpop.f32.mrb[0].mxu0
      %v2499 = vadd.f32 %v2306, %v2498
      %v2500 = vpop.f32.mrb[0].mxu0
      %v2501 = vadd.f32 %v2308, %v2500
      %v2502 = vpop.f32.mrb[0].mxu0
      %v2503 = vadd.f32 %v2310, %v2502
      %v2504 = vpop.f32.mrb[0].mxu0
      %v2505 = vadd.f32 %v2312, %v2504
      %2506 = vmatprep.mubr.bf16.mxu0 %v2004
      %2507 = vmatmul.mubr.bf16.gmra.mrb[0].mxu0 %v2003
      %v2508 = vpop.f32.mrb[0].mxu0
      %v2509 = vadd.f32 %v2316, %v2508
      %v2510 = vpop.f32.mrb[0].mxu0
      %v2511 = vadd.f32 %v2318, %v2510
      %v2512 = vpop.f32.mrb[0].mxu0
      %v2513 = vadd.f32 %v2320, %v2512
      %v2514 = vpop.f32.mrb[0].mxu0
      %v2515 = vadd.f32 %v2322, %v2514
      %2516 = vmatprep.mubr.bf16.mxu0 %v2012
      %2517 = vmatmul.mubr.bf16.gmra.mrb[0].mxu0 %v2011
      %v2518 = vpop.f32.mrb[0].mxu0
      %v2519 = vadd.f32 %v2326, %v2518
      %v2520 = vpop.f32.mrb[0].mxu0
      %v2521 = vadd.f32 %v2328, %v2520
      %v2522 = vpop.f32.mrb[0].mxu0
      %v2523 = vadd.f32 %v2330, %v2522
      %v2524 = vpop.f32.mrb[0].mxu0
      %v2525 = vadd.f32 %v2332, %v2524
      %2526 = vmatprep.mubr.bf16.mxu0 %v2020
      %2527 = vmatmul.mubr.bf16.gmra.mrb[0].mxu0 %v2019
      %v2528 = vpop.f32.mrb[0].mxu0
      %v2529 = vadd.f32 %v2336, %v2528
      %v2530 = vpop.f32.mrb[0].mxu0
      %v2531 = vadd.f32 %v2338, %v2530
      %v2532 = vpop.f32.mrb[0].mxu0
      %v2533 = vadd.f32 %v2340, %v2532
      %v2534 = vpop.f32.mrb[0].mxu0
      %v2535 = vadd.f32 %v2342, %v2534
      %2536 = vmatprep.mubr.bf16.mxu0 %v2028
      %2537 = vmatmul.mubr.bf16.gmra.mrb[0].mxu0 %v2027
      %v2538 = vpop.f32.mrb[0].mxu0
      %v2539 = vadd.f32 %v2346, %v2538
      %v2540 = vpop.f32.mrb[0].mxu0
      %v2541 = vadd.f32 %v2348, %v2540
      %v2542 = vpop.f32.mrb[0].mxu0
      %v2543 = vadd.f32 %v2350, %v2542
      %v2544 = vpop.f32.mrb[0].mxu0
      %v2545 = vadd.f32 %v2352, %v2544
      %2546 = vdwg.mxu0
      %2547 = vmatprep.subr.bf16.mxu0 %v1330
      %2548 = vmatpush1.bf16.msra.mxu0 %v1329
      %2549 = vmatprep.subr.bf16.mxu0 %v1332
      %2550 = vmatpush1.bf16.msra.mxu0 %v1331
      %2551 = vmatprep.subr.bf16.mxu0 %v1334
      %2552 = vmatpush1.bf16.msra.mxu0 %v1333
      %2553 = vmatprep.subr.bf16.mxu0 %v1336
      %2554 = vmatpush1.bf16.msra.mxu0 %v1335
      %2555 = vmatprep.subr.bf16.mxu0 %v1338
      %2556 = vmatpush1.bf16.msra.mxu0 %v1337
      %2557 = vmatprep.subr.bf16.mxu0 %v1340
      %2558 = vmatpush1.bf16.msra.mxu0 %v1339
      %2559 = vmatprep.subr.bf16.mxu0 %v1342
      %2560 = vmatpush1.bf16.msra.mxu0 %v1341
      %2561 = vmatprep.subr.bf16.mxu0 %v1344
      %2562 = vmatpush1.bf16.msra.mxu0 %v1343
      %2563 = vmatprep.subr.bf16.mxu0 %v1346
      %2564 = vmatpush1.bf16.msra.mxu0 %v1345
      %2565 = vmatprep.subr.bf16.mxu0 %v1348
      %2566 = vmatpush1.bf16.msra.mxu0 %v1347
      %2567 = vmatprep.subr.bf16.mxu0 %v1350
      %2568 = vmatpush1.bf16.msra.mxu0 %v1349
      %2569 = vmatprep.subr.bf16.mxu0 %v1352
      %2570 = vmatpush1.bf16.msra.mxu0 %v1351
      %2571 = vmatprep.subr.bf16.mxu0 %v1354
      %2572 = vmatpush1.bf16.msra.mxu0 %v1353
      %2573 = vmatprep.subr.bf16.mxu0 %v1356
      %2574 = vmatpush1.bf16.msra.mxu0 %v1355
      %2575 = vmatprep.subr.bf16.mxu0 %v1358
      %2576 = vmatpush1.bf16.msra.mxu0 %v1357
      %2577 = vmatprep.subr.bf16.mxu0 %v1360
      %2578 = vmatpush1.bf16.msra.mxu0 %v1359
      %2579 = vmatprep.mubr.bf16.mxu0 %v1910
      %2580 = vmatmul.mubr.bf16.gmra.mrb[0].mxu0 %v1909
      %v2581 = vpop.f32.mrb[0].mxu0
      %v2582 = vadd.f32 %v2389, %v2581
      %v2583 = vpop.f32.mrb[0].mxu0
      %v2584 = vadd.f32 %v2391, %v2583
      %v2585 = vpop.f32.mrb[0].mxu0
      %v2586 = vadd.f32 %v2393, %v2585
      %v2587 = vpop.f32.mrb[0].mxu0
      %v2588 = vadd.f32 %v2395, %v2587
      %2589 = vmatprep.mubr.bf16.mxu0 %v1918
      %2590 = vmatmul.mubr.bf16.gmra.mrb[0].mxu0 %v1917
      %v2591 = vpop.f32.mrb[0].mxu0
      %v2592 = vadd.f32 %v2399, %v2591
      %v2593 = vpop.f32.mrb[0].mxu0
      %v2594 = vadd.f32 %v2401, %v2593
      %v2595 = vpop.f32.mrb[0].mxu0
      %v2596 = vadd.f32 %v2403, %v2595
      %v2597 = vpop.f32.mrb[0].mxu0
      %v2598 = vadd.f32 %v2405, %v2597
      %2599 = vmatprep.mubr.bf16.mxu0 %v1926
      %2600 = vmatmul.mubr.bf16.gmra.mrb[0].mxu0 %v1925
      %v2601 = vpop.f32.mrb[0].mxu0
      %v2602 = vadd.f32 %v2409, %v2601
      %v2603 = vpop.f32.mrb[0].mxu0
      %v2604 = vadd.f32 %v2411, %v2603
      %v2605 = vpop.f32.mrb[0].mxu0
      %v2606 = vadd.f32 %v2413, %v2605
      %v2607 = vpop.f32.mrb[0].mxu0
      %v2608 = vadd.f32 %v2415, %v2607
      %2609 = vmatprep.mubr.bf16.mxu0 %v1934
      %2610 = vmatmul.mubr.bf16.gmra.mrb[0].mxu0 %v1933
      %v2611 = vpop.f32.mrb[0].mxu0
      %v2612 = vadd.f32 %v2419, %v2611
      %v2613 = vpop.f32.mrb[0].mxu0
      %v2614 = vadd.f32 %v2421, %v2613
      %v2615 = vpop.f32.mrb[0].mxu0
      %v2616 = vadd.f32 %v2423, %v2615
      %v2617 = vpop.f32.mrb[0].mxu0
      %v2618 = vadd.f32 %v2425, %v2617
      %2619 = vmatprep.mubr.bf16.mxu0 %v1942
      %2620 = vmatmul.mubr.bf16.gmra.mrb[0].mxu0 %v1941
      %v2621 = vpop.f32.mrb[0].mxu0
      %v2622 = vadd.f32 %v2429, %v2621
      %v2623 = vpop.f32.mrb[0].mxu0
      %v2624 = vadd.f32 %v2431, %v2623
      %v2625 = vpop.f32.mrb[0].mxu0
      %v2626 = vadd.f32 %v2433, %v2625
      %v2627 = vpop.f32.mrb[0].mxu0
      %v2628 = vadd.f32 %v2435, %v2627
      %2629 = vmatprep.mubr.bf16.mxu0 %v1950
      %2630 = vmatmul.mubr.bf16.gmra.mrb[0].mxu0 %v1949
      %v2631 = vpop.f32.mrb[0].mxu0
      %v2632 = vadd.f32 %v2439, %v2631
      %v2633 = vpop.f32.mrb[0].mxu0
      %v2634 = vadd.f32 %v2441, %v2633
      %v2635 = vpop.f32.mrb[0].mxu0
      %v2636 = vadd.f32 %v2443, %v2635
      %v2637 = vpop.f32.mrb[0].mxu0
      %v2638 = vadd.f32 %v2445, %v2637
      %2639 = vmatprep.mubr.bf16.mxu0 %v1958
      %2640 = vmatmul.mubr.bf16.gmra.mrb[0].mxu0 %v1957
      %v2641 = vpop.f32.mrb[0].mxu0
      %v2642 = vadd.f32 %v2449, %v2641
      %v2643 = vpop.f32.mrb[0].mxu0
      %v2644 = vadd.f32 %v2451, %v2643
      %v2645 = vpop.f32.mrb[0].mxu0
      %v2646 = vadd.f32 %v2453, %v2645
      %v2647 = vpop.f32.mrb[0].mxu0
      %v2648 = vadd.f32 %v2455, %v2647
      %2649 = vmatprep.mubr.bf16.mxu0 %v1966
      %2650 = vmatmul.mubr.bf16.gmra.mrb[0].mxu0 %v1965
      %v2651 = vpop.f32.mrb[0].mxu0
      %v2652 = vadd.f32 %v2459, %v2651
      %v2653 = vpop.f32.mrb[0].mxu0
      %v2654 = vadd.f32 %v2461, %v2653
      %v2655 = vpop.f32.mrb[0].mxu0
      %v2656 = vadd.f32 %v2463, %v2655
      %v2657 = vpop.f32.mrb[0].mxu0
      %v2658 = vadd.f32 %v2465, %v2657
      %2659 = vmatprep.mubr.bf16.mxu0 %v1974
      %2660 = vmatmul.mubr.bf16.gmra.mrb[0].mxu0 %v1973
      %v2661 = vpop.f32.mrb[0].mxu0
      %v2662 = vadd.f32 %v2469, %v2661
      %v2663 = vpop.f32.mrb[0].mxu0
      %v2664 = vadd.f32 %v2471, %v2663
      %v2665 = vpop.f32.mrb[0].mxu0
      %v2666 = vadd.f32 %v2473, %v2665
      %v2667 = vpop.f32.mrb[0].mxu0
      %v2668 = vadd.f32 %v2475, %v2667
      %2669 = vmatprep.mubr.bf16.mxu0 %v1982
      %2670 = vmatmul.mubr.bf16.gmra.mrb[0].mxu0 %v1981
      %v2671 = vpop.f32.mrb[0].mxu0
      %v2672 = vadd.f32 %v2479, %v2671
      %v2673 = vpop.f32.mrb[0].mxu0
      %v2674 = vadd.f32 %v2481, %v2673
      %v2675 = vpop.f32.mrb[0].mxu0
      %v2676 = vadd.f32 %v2483, %v2675
      %v2677 = vpop.f32.mrb[0].mxu0
      %v2678 = vadd.f32 %v2485, %v2677
      %2679 = vmatprep.mubr.bf16.mxu0 %v1990
      %2680 = vmatmul.mubr.bf16.gmra.mrb[0].mxu0 %v1989
      %v2681 = vpop.f32.mrb[0].mxu0
      %v2682 = vadd.f32 %v2489, %v2681
      %v2683 = vpop.f32.mrb[0].mxu0
      %v2684 = vadd.f32 %v2491, %v2683
      %v2685 = vpop.f32.mrb[0].mxu0
      %v2686 = vadd.f32 %v2493, %v2685
      %v2687 = vpop.f32.mrb[0].mxu0
      %v2688 = vadd.f32 %v2495, %v2687
      %2689 = vmatprep.mubr.bf16.mxu0 %v1998
      %2690 = vmatmul.mubr.bf16.gmra.mrb[0].mxu0 %v1997
      %v2691 = vpop.f32.mrb[0].mxu0
      %v2692 = vadd.f32 %v2499, %v2691
      %v2693 = vpop.f32.mrb[0].mxu0
      %v2694 = vadd.f32 %v2501, %v2693
      %v2695 = vpop.f32.mrb[0].mxu0
      %v2696 = vadd.f32 %v2503, %v2695
      %v2697 = vpop.f32.mrb[0].mxu0
      %v2698 = vadd.f32 %v2505, %v2697
      %2699 = vmatprep.mubr.bf16.mxu0 %v2006
      %2700 = vmatmul.mubr.bf16.gmra.mrb[0].mxu0 %v2005
      %v2701 = vpop.f32.mrb[0].mxu0
      %v2702 = vadd.f32 %v2509, %v2701
      %v2703 = vpop.f32.mrb[0].mxu0
      %v2704 = vadd.f32 %v2511, %v2703
      %v2705 = vpop.f32.mrb[0].mxu0
      %v2706 = vadd.f32 %v2513, %v2705
      %v2707 = vpop.f32.mrb[0].mxu0
      %v2708 = vadd.f32 %v2515, %v2707
      %2709 = vmatprep.mubr.bf16.mxu0 %v2014
      %2710 = vmatmul.mubr.bf16.gmra.mrb[0].mxu0 %v2013
      %v2711 = vpop.f32.mrb[0].mxu0
      %v2712 = vadd.f32 %v2519, %v2711
      %v2713 = vpop.f32.mrb[0].mxu0
      %v2714 = vadd.f32 %v2521, %v2713
      %v2715 = vpop.f32.mrb[0].mxu0
      %v2716 = vadd.f32 %v2523, %v2715
      %v2717 = vpop.f32.mrb[0].mxu0
      %v2718 = vadd.f32 %v2525, %v2717
      %2719 = vmatprep.mubr.bf16.mxu0 %v2022
      %2720 = vmatmul.mubr.bf16.gmra.mrb[0].mxu0 %v2021
      %v2721 = vpop.f32.mrb[0].mxu0
      %v2722 = vadd.f32 %v2529, %v2721
      %v2723 = vpop.f32.mrb[0].mxu0
      %v2724 = vadd.f32 %v2531, %v2723
      %v2725 = vpop.f32.mrb[0].mxu0
      %v2726 = vadd.f32 %v2533, %v2725
      %v2727 = vpop.f32.mrb[0].mxu0
      %v2728 = vadd.f32 %v2535, %v2727
      %2729 = vmatprep.mubr.bf16.mxu0 %v2030
      %2730 = vmatmul.mubr.bf16.gmra.mrb[0].mxu0 %v2029
      %v2731 = vpop.f32.mrb[0].mxu0
      %v2732 = vadd.f32 %v2539, %v2731
      %v2733 = vpop.f32.mrb[0].mxu0
      %v2734 = vadd.f32 %v2541, %v2733
      %v2735 = vpop.f32.mrb[0].mxu0
      %v2736 = vadd.f32 %v2543, %v2735
      %v2737 = vpop.f32.mrb[0].mxu0
      %v2738 = vadd.f32 %v2545, %v2737
      %2739 = vdwg.mxu0
      %2740 = vmatprep.subr.bf16.mxu0 %v1362
      %2741 = vmatpush1.bf16.msra.mxu0 %v1361
      %2742 = vmatprep.subr.bf16.mxu0 %v1364
      %2743 = vmatpush1.bf16.msra.mxu0 %v1363
      %2744 = vmatprep.subr.bf16.mxu0 %v1366
      %2745 = vmatpush1.bf16.msra.mxu0 %v1365
      %2746 = vmatprep.subr.bf16.mxu0 %v1368
      %2747 = vmatpush1.bf16.msra.mxu0 %v1367
      %2748 = vmatprep.subr.bf16.mxu0 %v1370
      %2749 = vmatpush1.bf16.msra.mxu0 %v1369
      %2750 = vmatprep.subr.bf16.mxu0 %v1372
      %2751 = vmatpush1.bf16.msra.mxu0 %v1371
      %2752 = vmatprep.subr.bf16.mxu0 %v1374
      %2753 = vmatpush1.bf16.msra.mxu0 %v1373
      %2754 = vmatprep.subr.bf16.mxu0 %v1376
      %2755 = vmatpush1.bf16.msra.mxu0 %v1375
      %2756 = vmatprep.subr.bf16.mxu0 %v1378
      %2757 = vmatpush1.bf16.msra.mxu0 %v1377
      %2758 = vmatprep.subr.bf16.mxu0 %v1380
      %2759 = vmatpush1.bf16.msra.mxu0 %v1379
      %2760 = vmatprep.subr.bf16.mxu0 %v1382
      %2761 = vmatpush1.bf16.msra.mxu0 %v1381
      %2762 = vmatprep.subr.bf16.mxu0 %v1384
      %2763 = vmatpush1.bf16.msra.mxu0 %v1383
      %2764 = vmatprep.subr.bf16.mxu0 %v1386
      %2765 = vmatpush1.bf16.msra.mxu0 %v1385
      %2766 = vmatprep.subr.bf16.mxu0 %v1388
      %2767 = vmatpush1.bf16.msra.mxu0 %v1387
      %2768 = vmatprep.subr.bf16.mxu0 %v1390
      %2769 = vmatpush1.bf16.msra.mxu0 %v1389
      %2770 = vmatprep.subr.bf16.mxu0 %v1392
      %2771 = vmatpush1.bf16.msra.mxu0 %v1391
      %2772 = vmatprep.mubr.bf16.mxu0 %v1912
      %2773 = vmatmul.mubr.bf16.gmra.mrb[0].mxu0 %v1911
      %v2774 = vpop.f32.mrb[0].mxu0
      %v2775 = vadd.f32 %v2582, %v2774
      %v2776 = vpop.f32.mrb[0].mxu0
      %v2777 = vadd.f32 %v2584, %v2776
      %v2778 = vpop.f32.mrb[0].mxu0
      %v2779 = vadd.f32 %v2586, %v2778
      %v2780 = vpop.f32.mrb[0].mxu0
      %v2781 = vadd.f32 %v2588, %v2780
      %2782 = vmatprep.mubr.bf16.mxu0 %v1920
      %2783 = vmatmul.mubr.bf16.gmra.mrb[0].mxu0 %v1919
      %v2784 = vpop.f32.mrb[0].mxu0
      %v2785 = vadd.f32 %v2592, %v2784
      %v2786 = vpop.f32.mrb[0].mxu0
      %v2787 = vadd.f32 %v2594, %v2786
      %v2788 = vpop.f32.mrb[0].mxu0
      %v2789 = vadd.f32 %v2596, %v2788
      %v2790 = vpop.f32.mrb[0].mxu0
      %v2791 = vadd.f32 %v2598, %v2790
      %2792 = vmatprep.mubr.bf16.mxu0 %v1928
      %2793 = vmatmul.mubr.bf16.gmra.mrb[0].mxu0 %v1927
      %v2794 = vpop.f32.mrb[0].mxu0
      %v2795 = vadd.f32 %v2602, %v2794
      %v2796 = vpop.f32.mrb[0].mxu0
      %v2797 = vadd.f32 %v2604, %v2796
      %v2798 = vpop.f32.mrb[0].mxu0
      %v2799 = vadd.f32 %v2606, %v2798
      %v2800 = vpop.f32.mrb[0].mxu0
      %v2801 = vadd.f32 %v2608, %v2800
      %2802 = vmatprep.mubr.bf16.mxu0 %v1936
      %2803 = vmatmul.mubr.bf16.gmra.mrb[0].mxu0 %v1935
      %v2804 = vpop.f32.mrb[0].mxu0
      %v2805 = vadd.f32 %v2612, %v2804
      %v2806 = vpop.f32.mrb[0].mxu0
      %v2807 = vadd.f32 %v2614, %v2806
      %v2808 = vpop.f32.mrb[0].mxu0
      %v2809 = vadd.f32 %v2616, %v2808
      %v2810 = vpop.f32.mrb[0].mxu0
      %v2811 = vadd.f32 %v2618, %v2810
      %2812 = vmatprep.mubr.bf16.mxu0 %v1944
      %2813 = vmatmul.mubr.bf16.gmra.mrb[0].mxu0 %v1943
      %v2814 = vpop.f32.mrb[0].mxu0
      %v2815 = vadd.f32 %v2622, %v2814
      %v2816 = vpop.f32.mrb[0].mxu0
      %v2817 = vadd.f32 %v2624, %v2816
      %v2818 = vpop.f32.mrb[0].mxu0
      %v2819 = vadd.f32 %v2626, %v2818
      %v2820 = vpop.f32.mrb[0].mxu0
      %v2821 = vadd.f32 %v2628, %v2820
      %2822 = vmatprep.mubr.bf16.mxu0 %v1952
      %2823 = vmatmul.mubr.bf16.gmra.mrb[0].mxu0 %v1951
      %v2824 = vpop.f32.mrb[0].mxu0
      %v2825 = vadd.f32 %v2632, %v2824
      %v2826 = vpop.f32.mrb[0].mxu0
      %v2827 = vadd.f32 %v2634, %v2826
      %v2828 = vpop.f32.mrb[0].mxu0
      %v2829 = vadd.f32 %v2636, %v2828
      %v2830 = vpop.f32.mrb[0].mxu0
      %v2831 = vadd.f32 %v2638, %v2830
      %2832 = vmatprep.mubr.bf16.mxu0 %v1960
      %2833 = vmatmul.mubr.bf16.gmra.mrb[0].mxu0 %v1959
      %v2834 = vpop.f32.mrb[0].mxu0
      %v2835 = vadd.f32 %v2642, %v2834
      %v2836 = vpop.f32.mrb[0].mxu0
      %v2837 = vadd.f32 %v2644, %v2836
      %v2838 = vpop.f32.mrb[0].mxu0
      %v2839 = vadd.f32 %v2646, %v2838
      %v2840 = vpop.f32.mrb[0].mxu0
      %v2841 = vadd.f32 %v2648, %v2840
      %2842 = vmatprep.mubr.bf16.mxu0 %v1968
      %2843 = vmatmul.mubr.bf16.gmra.mrb[0].mxu0 %v1967
      %v2844 = vpop.f32.mrb[0].mxu0
      %v2845 = vadd.f32 %v2652, %v2844
      %v2846 = vpop.f32.mrb[0].mxu0
      %v2847 = vadd.f32 %v2654, %v2846
      %v2848 = vpop.f32.mrb[0].mxu0
      %v2849 = vadd.f32 %v2656, %v2848
      %v2850 = vpop.f32.mrb[0].mxu0
      %v2851 = vadd.f32 %v2658, %v2850
      %2852 = vmatprep.mubr.bf16.mxu0 %v1976
      %2853 = vmatmul.mubr.bf16.gmra.mrb[0].mxu0 %v1975
      %v2854 = vpop.f32.mrb[0].mxu0
      %v2855 = vadd.f32 %v2662, %v2854
      %v2856 = vpop.f32.mrb[0].mxu0
      %v2857 = vadd.f32 %v2664, %v2856
      %v2858 = vpop.f32.mrb[0].mxu0
      %v2859 = vadd.f32 %v2666, %v2858
      %v2860 = vpop.f32.mrb[0].mxu0
      %v2861 = vadd.f32 %v2668, %v2860
      %2862 = vmatprep.mubr.bf16.mxu0 %v1984
      %2863 = vmatmul.mubr.bf16.gmra.mrb[0].mxu0 %v1983
      %v2864 = vpop.f32.mrb[0].mxu0
      %v2865 = vadd.f32 %v2672, %v2864
      %v2866 = vpop.f32.mrb[0].mxu0
      %v2867 = vadd.f32 %v2674, %v2866
      %v2868 = vpop.f32.mrb[0].mxu0
      %v2869 = vadd.f32 %v2676, %v2868
      %v2870 = vpop.f32.mrb[0].mxu0
      %v2871 = vadd.f32 %v2678, %v2870
      %2872 = vmatprep.mubr.bf16.mxu0 %v1992
      %2873 = vmatmul.mubr.bf16.gmra.mrb[0].mxu0 %v1991
      %v2874 = vpop.f32.mrb[0].mxu0
      %v2875 = vadd.f32 %v2682, %v2874
      %v2876 = vpop.f32.mrb[0].mxu0
      %v2877 = vadd.f32 %v2684, %v2876
      %v2878 = vpop.f32.mrb[0].mxu0
      %v2879 = vadd.f32 %v2686, %v2878
      %v2880 = vpop.f32.mrb[0].mxu0
      %v2881 = vadd.f32 %v2688, %v2880
      %2882 = vmatprep.mubr.bf16.mxu0 %v2000
      %2883 = vmatmul.mubr.bf16.gmra.mrb[0].mxu0 %v1999
      %v2884 = vpop.f32.mrb[0].mxu0
      %v2885 = vadd.f32 %v2692, %v2884
      %v2886 = vpop.f32.mrb[0].mxu0
      %v2887 = vadd.f32 %v2694, %v2886
      %v2888 = vpop.f32.mrb[0].mxu0
      %v2889 = vadd.f32 %v2696, %v2888
      %v2890 = vpop.f32.mrb[0].mxu0
      %v2891 = vadd.f32 %v2698, %v2890
      %2892 = vmatprep.mubr.bf16.mxu0 %v2008
      %2893 = vmatmul.mubr.bf16.gmra.mrb[0].mxu0 %v2007
      %v2894 = vpop.f32.mrb[0].mxu0
      %v2895 = vadd.f32 %v2702, %v2894
      %v2896 = vpop.f32.mrb[0].mxu0
      %v2897 = vadd.f32 %v2704, %v2896
      %v2898 = vpop.f32.mrb[0].mxu0
      %v2899 = vadd.f32 %v2706, %v2898
      %v2900 = vpop.f32.mrb[0].mxu0
      %v2901 = vadd.f32 %v2708, %v2900
      %2902 = vmatprep.mubr.bf16.mxu0 %v2016
      %2903 = vmatmul.mubr.bf16.gmra.mrb[0].mxu0 %v2015
      %v2904 = vpop.f32.mrb[0].mxu0
      %v2905 = vadd.f32 %v2712, %v2904
      %v2906 = vpop.f32.mrb[0].mxu0
      %v2907 = vadd.f32 %v2714, %v2906
      %v2908 = vpop.f32.mrb[0].mxu0
      %v2909 = vadd.f32 %v2716, %v2908
      %v2910 = vpop.f32.mrb[0].mxu0
      %v2911 = vadd.f32 %v2718, %v2910
      %2912 = vmatprep.mubr.bf16.mxu0 %v2024
      %2913 = vmatmul.mubr.bf16.gmra.mrb[0].mxu0 %v2023
      %v2914 = vpop.f32.mrb[0].mxu0
      %v2915 = vadd.f32 %v2722, %v2914
      %v2916 = vpop.f32.mrb[0].mxu0
      %v2917 = vadd.f32 %v2724, %v2916
      %v2918 = vpop.f32.mrb[0].mxu0
      %v2919 = vadd.f32 %v2726, %v2918
      %v2920 = vpop.f32.mrb[0].mxu0
      %v2921 = vadd.f32 %v2728, %v2920
      %2922 = vmatprep.mubr.bf16.mxu0 %v2032
      %2923 = vmatmul.mubr.bf16.gmra.mrb[0].mxu0 %v2031
      %v2924 = vpop.f32.mrb[0].mxu0
      %v2925 = vadd.f32 %v2732, %v2924
      %v2926 = vpop.f32.mrb[0].mxu0
      %v2927 = vadd.f32 %v2734, %v2926
      %v2928 = vpop.f32.mrb[0].mxu0
      %v2929 = vadd.f32 %v2736, %v2928
      %v2930 = vpop.f32.mrb[0].mxu0
      %v2931 = vadd.f32 %v2738, %v2930
      %2932 = vdwg.mxu0
      %2933 = vst [vmem:[%s239] sm:$0xff] %v2775
      %vm2934 = vcmask 556032
      %2935 = vst.msk [vmem:[%s239 + $0x8] sm:$0xff] %vm2934, %v2777
      %2936 = vst [vmem:[%s239 + $0x10] sm:$0xff] %v2779
      %2937 = vst.msk [vmem:[%s239 + $0x18] sm:$0xff] %vm2934, %v2781
      %2938 = vst [vmem:[%s239 + $0x20] sm:$0xff] %v2785
      %2939 = vst.msk [vmem:[%s239 + $0x28] sm:$0xff] %vm2934, %v2787
      %2940 = vst [vmem:[%s239 + $0x30] sm:$0xff] %v2789
      %2941 = vst.msk [vmem:[%s239 + $0x38] sm:$0xff] %vm2934, %v2791
      %2942 = vst [vmem:[%s239 + $0x40] sm:$0xff] %v2795
      %2943 = vst.msk [vmem:[%s239 + $0x48] sm:$0xff] %vm2934, %v2797
      %2944 = vst [vmem:[%s239 + $0x50] sm:$0xff] %v2799
      %2945 = vst.msk [vmem:[%s239 + $0x58] sm:$0xff] %vm2934, %v2801
      %2946 = vst [vmem:[%s239 + $0x60] sm:$0xff] %v2805
      %2947 = vst.msk [vmem:[%s239 + $0x68] sm:$0xff] %vm2934, %v2807
      %2948 = vst [vmem:[%s239 + $0x70] sm:$0xff] %v2809
      %2949 = vst.msk [vmem:[%s239 + $0x78] sm:$0xff] %vm2934, %v2811
      %2950 = vst [vmem:[%s239 + $0x80] sm:$0xff] %v2815
      %2951 = vst.msk [vmem:[%s239 + $0x88] sm:$0xff] %vm2934, %v2817
      %2952 = vst [vmem:[%s239 + $0x90] sm:$0xff] %v2819
      %2953 = vst.msk [vmem:[%s239 + $0x98] sm:$0xff] %vm2934, %v2821
      %2954 = vst [vmem:[%s239 + $0xa0] sm:$0xff] %v2825
      %2955 = vst.msk [vmem:[%s239 + $0xa8] sm:$0xff] %vm2934, %v2827
      %2956 = vst [vmem:[%s239 + $0xb0] sm:$0xff] %v2829
      %2957 = vst.msk [vmem:[%s239 + $0xb8] sm:$0xff] %vm2934, %v2831
      %2958 = vst [vmem:[%s239 + $0xc0] sm:$0xff] %v2835
      %2959 = vst.msk [vmem:[%s239 + $0xc8] sm:$0xff] %vm2934, %v2837
      %2960 = vst [vmem:[%s239 + $0xd0] sm:$0xff] %v2839
      %2961 = vst.msk [vmem:[%s239 + $0xd8] sm:$0xff] %vm2934, %v2841
      %2962 = vst [vmem:[%s239 + $0xe0] sm:$0xff] %v2845
      %2963 = vst.msk [vmem:[%s239 + $0xe8] sm:$0xff] %vm2934, %v2847
      %2964 = vst [vmem:[%s239 + $0xf0] sm:$0xff] %v2849
      %2965 = vst.msk [vmem:[%s239 + $0xf8] sm:$0xff] %vm2934, %v2851
      %2966 = vst [vmem:[%s239 + $0x100] sm:$0xff] %v2855
      %2967 = vst.msk [vmem:[%s239 + $0x108] sm:$0xff] %vm2934, %v2857
      %2968 = vst [vmem:[%s239 + $0x110] sm:$0xff] %v2859
      %2969 = vst.msk [vmem:[%s239 + $0x118] sm:$0xff] %vm2934, %v2861
      %2970 = vst [vmem:[%s239 + $0x120] sm:$0xff] %v2865
      %2971 = vst.msk [vmem:[%s239 + $0x128] sm:$0xff] %vm2934, %v2867
      %2972 = vst [vmem:[%s239 + $0x130] sm:$0xff] %v2869
      %2973 = vst.msk [vmem:[%s239 + $0x138] sm:$0xff] %vm2934, %v2871
      %2974 = vst [vmem:[%s239 + $0x140] sm:$0xff] %v2875
      %2975 = vst.msk [vmem:[%s239 + $0x148] sm:$0xff] %vm2934, %v2877
      %2976 = vst [vmem:[%s239 + $0x150] sm:$0xff] %v2879
      %2977 = vst.msk [vmem:[%s239 + $0x158] sm:$0xff] %vm2934, %v2881
      %2978 = vst [vmem:[%s239 + $0x160] sm:$0xff] %v2885
      %2979 = vst.msk [vmem:[%s239 + $0x168] sm:$0xff] %vm2934, %v2887
      %2980 = vst [vmem:[%s239 + $0x170] sm:$0xff] %v2889
      %2981 = vst.msk [vmem:[%s239 + $0x178] sm:$0xff] %vm2934, %v2891
      %2982 = vst [vmem:[%s239 + $0x180] sm:$0xff] %v2895
      %2983 = vst.msk [vmem:[%s239 + $0x188] sm:$0xff] %vm2934, %v2897
      %2984 = vst [vmem:[%s239 + $0x190] sm:$0xff] %v2899
      %2985 = vst.msk [vmem:[%s239 + $0x198] sm:$0xff] %vm2934, %v2901
      %2986 = vst [vmem:[%s239 + $0x1a0] sm:$0xff] %v2905
      %2987 = vst.msk [vmem:[%s239 + $0x1a8] sm:$0xff] %vm2934, %v2907
      %2988 = vst [vmem:[%s239 + $0x1b0] sm:$0xff] %v2909
      %2989 = vst.msk [vmem:[%s239 + $0x1b8] sm:$0xff] %vm2934, %v2911
      %2990 = vst [vmem:[%s239 + $0x1c0] sm:$0xff] %v2915
      %2991 = vst.msk [vmem:[%s239 + $0x1c8] sm:$0xff] %vm2934, %v2917
      %2992 = vst [vmem:[%s239 + $0x1d0] sm:$0xff] %v2919
      %2993 = vst.msk [vmem:[%s239 + $0x1d8] sm:$0xff] %vm2934, %v2921
      %2994 = vst [vmem:[%s239 + $0x1e0] sm:$0xff] %v2925
      %2995 = vst.msk [vmem:[%s239 + $0x1e8] sm:$0xff] %vm2934, %v2927
      %2996 = vst [vmem:[%s239 + $0x1f0] sm:$0xff] %v2929
      %2997 = vst.msk [vmem:[%s239 + $0x1f8] sm:$0xff] %vm2934, %v2931
      %s2998 = smul.u32 32, %s18
      %p2999 = scmp.lt.s32.totalorder %s19, 0
      %s3000 = scalar_select %p2999, %s19, 0
      %p3001 = scmp.lt.s32.totalorder %s2998, 127
      %s3002 = scalar_select %p3001, %s2998, 127
      %s3003 = smul.addr %s3002, 2
      %s3004 = smul.addr %s3000, 256
      %s3005 = sadd.s32 %s3003, %s3004
      %s3006 = smul.addr %s3005, 8
      %s3007 = scalar_lea.vmem %s3, %s3006
      // Predicated region
      $region33: #{tpu_custom_call.1} parent=31 // pred_check
        %p3008 = pneg %p124
      $region34: #{tpu_custom_call.1} parent=31 // pred_check_branch
        %3010 = sbr.rel (%p3008) target = $region36
      $region35: #{tpu_custom_call.1} parent=31 // pred_region
        %s3011 = smul.u32 32, %s18
      $region36: #{tpu_custom_call.1} parent=31 // pred_fallthru
        _
    $region32: #{tpu_custom_call.1} parent=5 // pred_fallthru
      _
    %p3012 = scmp.le.s32.totalorder 2, %s9
    // Predicated region
    $region37: #{tpu_custom_call.1} parent=5 // pred_check
      %p3013 = pneg %p3012
    $region38: #{tpu_custom_call.1} parent=5 // pred_check_branch
      %3015 = sbr.rel (%p3013) target = $region40
    $region39: #{tpu_custom_call.1} parent=5 // pred_region
      %s3016 = ssub.s32 %s9, 2
      // Predicated region
      $region41: #{tpu_custom_call.1} parent=39 // pred_check
        %p3017 = pneg %p130
      $region42: #{tpu_custom_call.1} parent=39 // pred_check_branch
        %3019 = sbr.rel (%p3017) target = $region44
      $region43: #{tpu_custom_call.1} parent=39 // pred_region
        %s3020 = smul.u32 32, %s20
        %p3021 = scmp.lt.s32.totalorder %s21, 0
        %s3022 = scalar_select %p3021, %s21, 0
        %p3023 = scmp.lt.s32.totalorder %s3020, 127
        %s3024 = scalar_select %p3023, %s3020, 127
        %s3025 = smul.addr %s3024, 2
        %s3026 = smul.addr %s3022, 256
        %s3027 = sadd.s32 %s3025, %s3026
        %s3028 = smul.addr %s3027, 8
        %s3029 = scalar_lea.vmem %s3, %s3028
      $region44: #{tpu_custom_call.1} parent=39 // pred_fallthru
        _
    $region40: #{tpu_custom_call.1} parent=5 // pred_fallthru
      _
  $region6: #{tpu_custom_call.1} parent=0 // loop_footer
    %s13 = sadd.s32 1, %s9
  $region7: #{tpu_custom_call.1} parent=0 // loop_footer_branch
    %8 = sbr.rel target = $region3
  $region8: #{tpu_custom_call.1} parent=0 // loop_exit
    _

</llo_original>
